<compile_context>
chip_gen: v7x
topology: tpu7x:2x2x1
jax: 0.10.0
libtpu: 0.0.40
codegen_flags: <defaults>
</compile_context>

<pallas_src>
import math

import jax
import jax.numpy as jnp
from jax.experimental import pallas as pl
from jax.experimental.pallas import tpu as pltpu


def atae_kernel(x_ref, mask_ref, wih_ref, whh_ref, bl_ref,
                v_ref, wd_ref, bd_ref, out_ref):
    """Fused LSTM recurrence + (precomposed) bi-linear attention + dense head.

    x_ref    : (L*B, 2E) bf16  time-major, rows [t*B:(t+1)*B] are step t
    mask_ref : (L*B, 1)  f32   1.0 for valid steps, 0.0 for padding
    wih_ref  : (2E, 4H)  bf16  LSTM input weights (transposed, gates i,f,g,o)
    whh_ref  : (H, 4H)   bf16  LSTM recurrent weights (transposed)
    bl_ref   : (1, 4H)   f32   b_ih + b_hh
    v_ref    : (1, H)    f32   precomposed attention vector (qw @ Wk[:H]^T)
    wd_ref   : (H, Pp)   f32   dense weights (transposed, zero-padded lanes)
    bd_ref   : (1, Pp)   f32
    out_ref  : (B, Pp)   f32
    """
    H = whh_ref.shape[0]
    H4 = whh_ref.shape[1]
    B = out_ref.shape[0]
    LB = x_ref.shape[0]
    L = LB // B

    # ---- hoisted input projection: one big bf16 matmul off the serial chain
    gates_in = (jnp.dot(x_ref[...], wih_ref[...],
                        preferred_element_type=jnp.float32)
                + bl_ref[...])                              # (L*B, 4H) f32

    # hoist all loop-invariant loads / broadcasts out of the recurrence
    whh = whh_ref[...]                                      # (H, 4H) bf16
    mask_all = mask_ref[...]                                # (L*B, 1) f32
    v_b = jnp.broadcast_to(v_ref[...], (B, H))              # (B, H)  f32

    # ---- LSTM recurrence (pack_padded semantics: frozen carry + zero output
    # ---- at padded steps).  Only h @ W_hh + gate math is on the serial chain;
    # ---- the attention logit is folded in but off the (h, c) dependency.
    h = jnp.zeros((B, H), jnp.float32)
    c = jnp.zeros((B, H), jnp.float32)
    hs = []     # masked hidden states h_t            (B, H) f32
    lgs = []    # attention logits h_t . v            (B, 1) f32
    for t in range(L):                                  # fully unrolled (L=8)
        g_in = gates_in[t * B:(t + 1) * B, :]               # (B, 4H) static
        gates = g_in + jnp.dot(h.astype(jnp.bfloat16), whh,
                               preferred_element_type=jnp.float32)
        if H4 <= 128:
            # whole (B, 4H) tile is one vreg: two full-width EUP passes
            sg = jax.nn.sigmoid(gates)
            th = jnp.tanh(gates)
            i_g = sg[:, 0:H]
            f_g = sg[:, H:2 * H]
            g_g = th[:, 2 * H:3 * H]
            o_g = sg[:, 3 * H:4 * H]
        else:
            # avoid redundant EUP vreg passes when 4H spans multiple vregs
            i_g = jax.nn.sigmoid(gates[:, 0:H])
            f_g = jax.nn.sigmoid(gates[:, H:2 * H])
            g_g = jnp.tanh(gates[:, 2 * H:3 * H])
            o_g = jax.nn.sigmoid(gates[:, 3 * H:4 * H])
        c_new = f_g * c + i_g * g_g
        h_new = o_g * jnp.tanh(c_new)

        keep = mask_all[t * B:(t + 1) * B, :] > 0.0          # (B, 1)
        h_m = jnp.where(keep, h_new, 0.0)                    # zero at padding
        hs.append(h_m)
        # bi-linear attention logit: VPU mul + XLU lane reduce (no MXU)
        lgs.append(jnp.sum(h_m * v_b, axis=-1, keepdims=True))  # (B, 1)

        h = jnp.where(keep, h_new, h)
        c = jnp.where(keep, c_new, c)

    # ---- softmax over time (aspect/bias terms are constant over L and cancel
    # ---- exactly in the softmax, so they were precomposed away) -------------
    m = lgs[0]
    for t in range(1, L):
        m = jnp.maximum(m, lgs[t])
    es = [jnp.exp(lg - m) for lg in lgs]                     # (B, 1) each
    den = es[0]
    for t in range(1, L):
        den = den + es[t]
    acc = es[0] * hs[0]
    for t in range(1, L):
        acc = acc + es[t] * hs[t]
    attn_out = acc * pl.reciprocal(den, approx=True)         # (B, H)

    # ---- dense head (lane-dense, unmasked (B, Pp) store) ---------------------
    out_ref[...] = (jnp.dot(attn_out, wd_ref[...],
                            preferred_element_type=jnp.float32)
                    + bd_ref[...])


def atae_lstm_forward(text_idx, aspect_idx, p):
    """Glue (embedding lookup, pooling, concat, precomposition) + kernel."""
    B, L = text_idx.shape
    E = p["emb"].shape[1]
    H = p["w_hh_t"].shape[0]
    P = p["w_d_t"].shape[1]

    x_len = jnp.sum(text_idx != 0, axis=-1)                       # (B,)
    aspect_len = jnp.sum(aspect_idx != 0, axis=-1).astype(jnp.float32)

    x = p["emb"][text_idx]                                        # (B, L, E)
    mask = (jnp.arange(L)[None, :] < x_len[:, None]).astype(jnp.float32)
    x = x * mask[:, :, None]                    # SqueezeEmbedding zero pads

    aspect_e = p["emb"][aspect_idx]                               # (B, La, E)
    aspect_pool = jnp.sum(aspect_e, axis=1) / aspect_len[:, None]  # (B, E)

    asp_exp = jnp.broadcast_to(aspect_pool[:, None, :], (B, L, E))
    x_cat = jnp.concatenate([asp_exp, x], axis=-1)                # (B, L, 2E)

    # pad batch to a full sublane group (8); pad rows are zero and fully
    # masked, then sliced off below
    BP = ((B + 7) // 8) * 8
    x_cat = jnp.pad(x_cat, ((0, BP - B), (0, 0), (0, 0)))
    mask_p = jnp.pad(mask, ((0, BP - B), (0, 0)))

    # wrapper-side time-major flattening (free metadata; no in-kernel reshape)
    x2d = jnp.transpose(x_cat, (1, 0, 2)).reshape(L * BP, 2 * E)
    x2d = x2d.astype(jnp.bfloat16)                                # MXU operand
    mask2d = jnp.transpose(mask_p).reshape(L * BP, 1)

    # ---- parameter-only precomposition of the bi-linear attention ----------
    # qw = (q @ Wq^T + bq) @ att_w ; only the h-dependent part of
    # (cat(h, asp) @ Wk^T + bk) . qw survives the softmax
    qw = (p["q"] @ p["w_q_t"] + p["b_q"]) @ p["att_w"]            # (1, H+E)
    v_row = (p["w_k_t"][:H, :] @ qw.T).T                          # (1, H)

    # bf16 MXU operands for the LSTM matmuls
    wih = p["w_ih_t"].astype(jnp.bfloat16)
    whh = p["w_hh_t"].astype(jnp.bfloat16)

    # pad the dense head to a lane-dense 128-wide output
    PP = 128
    wd = jnp.pad(p["w_d_t"], ((0, 0), (0, PP - P)))
    bd = jnp.pad(p["b_d"], ((0, 0), (0, PP - P)))

    vmem = pl.BlockSpec(memory_space=pltpu.MemorySpace.VMEM)
    out = pl.pallas_call(
        atae_kernel,
        out_shape=jax.ShapeDtypeStruct((BP, PP), jnp.float32),
        in_specs=[vmem] * 8,
        out_specs=vmem,
    )(x2d, mask2d, wih, whh, p["b_lstm"], v_row, wd, bd)
    return out[:B, :P]


def make_params(key, vocab, embed_dim, hidden_dim, polarities_dim):
    E, H, P = embed_dim, hidden_dim, polarities_dim
    HE = H + E
    ks = jax.random.split(key, 16)

    def u(k, shape, scale):
        return jax.random.uniform(k, shape, jnp.float32, -scale, scale)

    s_lstm = 1.0 / math.sqrt(H)
    s_att = 1.0 / math.sqrt(HE)
    s_d = 1.0 / math.sqrt(H)

    b_ih = u(ks[3], (4 * H,), s_lstm)
    b_hh = u(ks[4], (4 * H,), s_lstm)

    return {
        "emb":    u(ks[0], (vocab, E), 0.5),
        "w_ih_t": u(ks[1], (2 * E, 4 * H), s_lstm),
        "w_hh_t": u(ks[2], (H, 4 * H), s_lstm),
        "b_lstm": (b_ih + b_hh).reshape(1, 4 * H),
        "w_k_t":  u(ks[5], (HE, HE), s_att),
        "b_k":    u(ks[6], (1, HE), s_att),
        "w_q_t":  u(ks[7], (HE, HE), s_att),
        "b_q":    u(ks[8], (1, HE), s_att),
        "att_w":  u(ks[9], (HE, HE), s_att),
        "q":      u(ks[10], (1, HE), s_att),
        "w_d_t":  u(ks[11], (H, P), s_d),
        "b_d":    u(ks[12], (1, P), s_d),
    }


if __name__ == "__main__":
    # opt: embed_dim=32, hidden_dim=32, polarities_dim=3; vocab=24
    VOCAB, E, H, P = 24, 32, 32, 3
    B, L, LA = 2, 8, 4

    key = jax.random.PRNGKey(0)
    params = make_params(key, VOCAB, E, H, P)

    # text indices: row 0 is full length (so max(x_len) == L), row 1 is padded
    text_raw_indices = jnp.array(
        [[3, 7, 2, 9, 4, 11, 6, 5],
         [8, 1, 13, 4, 2, 0, 0, 0]], dtype=jnp.int32)
    aspect_indices = jnp.array(
        [[5, 9, 0, 0],
         [12, 3, 7, 0]], dtype=jnp.int32)

    out = atae_lstm_forward(text_raw_indices, aspect_indices, params)
    out = jax.block_until_ready(out)
    assert out.shape == (B, P)
    assert bool(jnp.all(jnp.isfinite(out)))
    print("KERNEL_OK")
</pallas_src>

<mosaic_0001>
module attributes {stable_mosaic.version = 11 : i64} {
  func.func @atae_kernel(%arg0: memref<64x64xbf16, #tpu.memory_space<vmem>>, %arg1: memref<64x1xf32, #tpu.memory_space<vmem>>, %arg2: memref<64x128xbf16, #tpu.memory_space<vmem>>, %arg3: memref<32x128xbf16, #tpu.memory_space<vmem>>, %arg4: memref<1x128xf32, #tpu.memory_space<vmem>>, %arg5: memref<1x32xf32, #tpu.memory_space<vmem>>, %arg6: memref<32x128xf32, #tpu.memory_space<vmem>>, %arg7: memref<1x128xf32, #tpu.memory_space<vmem>>, %arg8: memref<8x128xf32, #tpu.memory_space<vmem>>) attributes {dimension_semantics = [], scalar_prefetch = 0 : i64, scratch_operands = 0 : i64, tpu.core_type = #tpu.core_type<tc>} {
    %c0 = arith.constant 0 : index
    %c0_0 = arith.constant 0 : index
    %0 = vector.load %arg0[%c0, %c0_0] : memref<64x64xbf16, #tpu.memory_space<vmem>>, vector<64x64xbf16>
    %c0_1 = arith.constant 0 : index
    %c0_2 = arith.constant 0 : index
    %1 = vector.load %arg2[%c0_1, %c0_2] : memref<64x128xbf16, #tpu.memory_space<vmem>>, vector<64x128xbf16>
    %cst = arith.constant dense<0.000000e+00> : vector<64x128xf32>
    %2 = tpu.matmul %0, %1, %cst {dimension_numbers = #tpu.dot_dimension_numbers<[1], [0], [0], [1], [0, 0, 1, 1], [], []>} : vector<64x64xbf16>, vector<64x128xbf16>, vector<64x128xf32> -> vector<64x128xf32>
    %c0_3 = arith.constant 0 : index
    %c0_4 = arith.constant 0 : index
    %3 = vector.load %arg4[%c0_3, %c0_4] : memref<1x128xf32, #tpu.memory_space<vmem>>, vector<1x128xf32>
    %4 = vector.broadcast %3 : vector<1x128xf32> to vector<64x128xf32>
    %5 = arith.addf %2, %4 : vector<64x128xf32>
    %c0_5 = arith.constant 0 : index
    %c0_6 = arith.constant 0 : index
    %6 = vector.load %arg3[%c0_5, %c0_6] : memref<32x128xbf16, #tpu.memory_space<vmem>>, vector<32x128xbf16>
    %c0_7 = arith.constant 0 : index
    %c0_8 = arith.constant 0 : index
    %7 = vector.load %arg1[%c0_7, %c0_8] : memref<64x1xf32, #tpu.memory_space<vmem>>, vector<64x1xf32>
    %c0_9 = arith.constant 0 : index
    %c0_10 = arith.constant 0 : index
    %8 = vector.load %arg5[%c0_9, %c0_10] : memref<1x32xf32, #tpu.memory_space<vmem>>, vector<1x32xf32>
    %9 = vector.shape_cast %8 : vector<1x32xf32> to vector<1x32xf32>
    %10 = vector.broadcast %9 : vector<1x32xf32> to vector<8x32xf32>
    %cst_11 = arith.constant 0.000000e+00 : f32
    %11 = vector.broadcast %cst_11 : f32 to vector<8x32xf32>
    %cst_12 = arith.constant 0.000000e+00 : f32
    %12 = vector.broadcast %cst_12 : f32 to vector<8x32xf32>
    %13 = vector.extract_strided_slice %5 {offsets = [0, 0], sizes = [8, 128], strides = [1, 1]} : vector<64x128xf32> to vector<8x128xf32>
    %14 = arith.truncf %11 : vector<8x32xf32> to vector<8x32xbf16>
    %cst_13 = arith.constant dense<0.000000e+00> : vector<8x128xf32>
    %15 = tpu.matmul %14, %6, %cst_13 {dimension_numbers = #tpu.dot_dimension_numbers<[1], [0], [0], [1], [0, 0, 1, 1], [], []>} : vector<8x32xbf16>, vector<32x128xbf16>, vector<8x128xf32> -> vector<8x128xf32>
    %16 = arith.addf %13, %15 : vector<8x128xf32>
    %17 = arith.negf %16 : vector<8x128xf32>
    %18 = math.exp %17 : vector<8x128xf32>
    %cst_14 = arith.constant 1.000000e+00 : f32
    %19 = vector.broadcast %cst_14 : f32 to vector<8x128xf32>
    %20 = arith.addf %19, %18 : vector<8x128xf32>
    %21 = arith.divf %19, %20 : vector<8x128xf32>
    %22 = math.tanh %16 : vector<8x128xf32>
    %23 = vector.extract_strided_slice %21 {offsets = [0, 0], sizes = [8, 32], strides = [1, 1]} : vector<8x128xf32> to vector<8x32xf32>
    %24 = vector.extract_strided_slice %21 {offsets = [0, 32], sizes = [8, 32], strides = [1, 1]} : vector<8x128xf32> to vector<8x32xf32>
    %25 = vector.extract_strided_slice %22 {offsets = [0, 64], sizes = [8, 32], strides = [1, 1]} : vector<8x128xf32> to vector<8x32xf32>
    %26 = vector.extract_strided_slice %21 {offsets = [0, 96], sizes = [8, 32], strides = [1, 1]} : vector<8x128xf32> to vector<8x32xf32>
    %27 = arith.mulf %24, %12 : vector<8x32xf32>
    %28 = arith.mulf %23, %25 : vector<8x32xf32>
    %29 = arith.addf %27, %28 : vector<8x32xf32>
    %30 = math.tanh %29 : vector<8x32xf32>
    %31 = arith.mulf %26, %30 : vector<8x32xf32>
    %32 = vector.extract_strided_slice %7 {offsets = [0, 0], sizes = [8, 1], strides = [1, 1]} : vector<64x1xf32> to vector<8x1xf32>
    %cst_15 = arith.constant 0.000000e+00 : f32
    %33 = vector.broadcast %cst_15 : f32 to vector<8x1xf32>
    %34 = arith.cmpf ogt, %32, %33 : vector<8x1xf32>
    %cst_16 = arith.constant 0.000000e+00 : f32
    %35 = vector.shape_cast %34 : vector<8x1xi1> to vector<8x1xi1>
    %36 = vector.broadcast %35 : vector<8x1xi1> to vector<8x32xi1>
    %37 = vector.broadcast %cst_16 : f32 to vector<8x32xf32>
    %38 = arith.select %36, %31, %37 : vector<8x32xi1>, vector<8x32xf32>
    %39 = arith.mulf %38, %10 : vector<8x32xf32>
    %cst_17 = arith.constant dense<0.000000e+00> : vector<8xf32>
    %40 = vector.multi_reduction <add>, %39, %cst_17 [1] : vector<8x32xf32> to vector<8xf32>
    %41 = vector.shape_cast %40 : vector<8xf32> to vector<8x1xf32>
    %42 = vector.shape_cast %34 : vector<8x1xi1> to vector<8x1xi1>
    %43 = vector.broadcast %42 : vector<8x1xi1> to vector<8x32xi1>
    %44 = arith.select %43, %31, %11 : vector<8x32xi1>, vector<8x32xf32>
    %45 = vector.shape_cast %34 : vector<8x1xi1> to vector<8x1xi1>
    %46 = vector.broadcast %45 : vector<8x1xi1> to vector<8x32xi1>
    %47 = arith.select %46, %29, %12 : vector<8x32xi1>, vector<8x32xf32>
    %48 = vector.extract_strided_slice %5 {offsets = [8, 0], sizes = [8, 128], strides = [1, 1]} : vector<64x128xf32> to vector<8x128xf32>
    %49 = arith.truncf %44 : vector<8x32xf32> to vector<8x32xbf16>
    %cst_18 = arith.constant dense<0.000000e+00> : vector<8x128xf32>
    %50 = tpu.matmul %49, %6, %cst_18 {dimension_numbers = #tpu.dot_dimension_numbers<[1], [0], [0], [1], [0, 0, 1, 1], [], []>} : vector<8x32xbf16>, vector<32x128xbf16>, vector<8x128xf32> -> vector<8x128xf32>
    %51 = arith.addf %48, %50 : vector<8x128xf32>
    %52 = arith.negf %51 : vector<8x128xf32>
    %53 = math.exp %52 : vector<8x128xf32>
    %cst_19 = arith.constant 1.000000e+00 : f32
    %54 = vector.broadcast %cst_19 : f32 to vector<8x128xf32>
    %55 = arith.addf %54, %53 : vector<8x128xf32>
    %56 = arith.divf %54, %55 : vector<8x128xf32>
    %57 = math.tanh %51 : vector<8x128xf32>
    %58 = vector.extract_strided_slice %56 {offsets = [0, 0], sizes = [8, 32], strides = [1, 1]} : vector<8x128xf32> to vector<8x32xf32>
    %59 = vector.extract_strided_slice %56 {offsets = [0, 32], sizes = [8, 32], strides = [1, 1]} : vector<8x128xf32> to vector<8x32xf32>
    %60 = vector.extract_strided_slice %57 {offsets = [0, 64], sizes = [8, 32], strides = [1, 1]} : vector<8x128xf32> to vector<8x32xf32>
    %61 = vector.extract_strided_slice %56 {offsets = [0, 96], sizes = [8, 32], strides = [1, 1]} : vector<8x128xf32> to vector<8x32xf32>
    %62 = arith.mulf %59, %47 : vector<8x32xf32>
    %63 = arith.mulf %58, %60 : vector<8x32xf32>
    %64 = arith.addf %62, %63 : vector<8x32xf32>
    %65 = math.tanh %64 : vector<8x32xf32>
    %66 = arith.mulf %61, %65 : vector<8x32xf32>
    %67 = vector.extract_strided_slice %7 {offsets = [8, 0], sizes = [8, 1], strides = [1, 1]} : vector<64x1xf32> to vector<8x1xf32>
    %cst_20 = arith.constant 0.000000e+00 : f32
    %68 = vector.broadcast %cst_20 : f32 to vector<8x1xf32>
    %69 = arith.cmpf ogt, %67, %68 : vector<8x1xf32>
    %cst_21 = arith.constant 0.000000e+00 : f32
    %70 = vector.shape_cast %69 : vector<8x1xi1> to vector<8x1xi1>
    %71 = vector.broadcast %70 : vector<8x1xi1> to vector<8x32xi1>
    %72 = vector.broadcast %cst_21 : f32 to vector<8x32xf32>
    %73 = arith.select %71, %66, %72 : vector<8x32xi1>, vector<8x32xf32>
    %74 = arith.mulf %73, %10 : vector<8x32xf32>
    %cst_22 = arith.constant dense<0.000000e+00> : vector<8xf32>
    %75 = vector.multi_reduction <add>, %74, %cst_22 [1] : vector<8x32xf32> to vector<8xf32>
    %76 = vector.shape_cast %75 : vector<8xf32> to vector<8x1xf32>
    %77 = vector.shape_cast %69 : vector<8x1xi1> to vector<8x1xi1>
    %78 = vector.broadcast %77 : vector<8x1xi1> to vector<8x32xi1>
    %79 = arith.select %78, %66, %44 : vector<8x32xi1>, vector<8x32xf32>
    %80 = vector.shape_cast %69 : vector<8x1xi1> to vector<8x1xi1>
    %81 = vector.broadcast %80 : vector<8x1xi1> to vector<8x32xi1>
    %82 = arith.select %81, %64, %47 : vector<8x32xi1>, vector<8x32xf32>
    %83 = vector.extract_strided_slice %5 {offsets = [16, 0], sizes = [8, 128], strides = [1, 1]} : vector<64x128xf32> to vector<8x128xf32>
    %84 = arith.truncf %79 : vector<8x32xf32> to vector<8x32xbf16>
    %cst_23 = arith.constant dense<0.000000e+00> : vector<8x128xf32>
    %85 = tpu.matmul %84, %6, %cst_23 {dimension_numbers = #tpu.dot_dimension_numbers<[1], [0], [0], [1], [0, 0, 1, 1], [], []>} : vector<8x32xbf16>, vector<32x128xbf16>, vector<8x128xf32> -> vector<8x128xf32>
    %86 = arith.addf %83, %85 : vector<8x128xf32>
    %87 = arith.negf %86 : vector<8x128xf32>
    %88 = math.exp %87 : vector<8x128xf32>
    %cst_24 = arith.constant 1.000000e+00 : f32
    %89 = vector.broadcast %cst_24 : f32 to vector<8x128xf32>
    %90 = arith.addf %89, %88 : vector<8x128xf32>
    %91 = arith.divf %89, %90 : vector<8x128xf32>
    %92 = math.tanh %86 : vector<8x128xf32>
    %93 = vector.extract_strided_slice %91 {offsets = [0, 0], sizes = [8, 32], strides = [1, 1]} : vector<8x128xf32> to vector<8x32xf32>
    %94 = vector.extract_strided_slice %91 {offsets = [0, 32], sizes = [8, 32], strides = [1, 1]} : vector<8x128xf32> to vector<8x32xf32>
    %95 = vector.extract_strided_slice %92 {offsets = [0, 64], sizes = [8, 32], strides = [1, 1]} : vector<8x128xf32> to vector<8x32xf32>
    %96 = vector.extract_strided_slice %91 {offsets = [0, 96], sizes = [8, 32], strides = [1, 1]} : vector<8x128xf32> to vector<8x32xf32>
    %97 = arith.mulf %94, %82 : vector<8x32xf32>
    %98 = arith.mulf %93, %95 : vector<8x32xf32>
    %99 = arith.addf %97, %98 : vector<8x32xf32>
    %100 = math.tanh %99 : vector<8x32xf32>
    %101 = arith.mulf %96, %100 : vector<8x32xf32>
    %102 = vector.extract_strided_slice %7 {offsets = [16, 0], sizes = [8, 1], strides = [1, 1]} : vector<64x1xf32> to vector<8x1xf32>
    %cst_25 = arith.constant 0.000000e+00 : f32
    %103 = vector.broadcast %cst_25 : f32 to vector<8x1xf32>
    %104 = arith.cmpf ogt, %102, %103 : vector<8x1xf32>
    %cst_26 = arith.constant 0.000000e+00 : f32
    %105 = vector.shape_cast %104 : vector<8x1xi1> to vector<8x1xi1>
    %106 = vector.broadcast %105 : vector<8x1xi1> to vector<8x32xi1>
    %107 = vector.broadcast %cst_26 : f32 to vector<8x32xf32>
    %108 = arith.select %106, %101, %107 : vector<8x32xi1>, vector<8x32xf32>
    %109 = arith.mulf %108, %10 : vector<8x32xf32>
    %cst_27 = arith.constant dense<0.000000e+00> : vector<8xf32>
    %110 = vector.multi_reduction <add>, %109, %cst_27 [1] : vector<8x32xf32> to vector<8xf32>
    %111 = vector.shape_cast %110 : vector<8xf32> to vector<8x1xf32>
    %112 = vector.shape_cast %104 : vector<8x1xi1> to vector<8x1xi1>
    %113 = vector.broadcast %112 : vector<8x1xi1> to vector<8x32xi1>
    %114 = arith.select %113, %101, %79 : vector<8x32xi1>, vector<8x32xf32>
    %115 = vector.shape_cast %104 : vector<8x1xi1> to vector<8x1xi1>
    %116 = vector.broadcast %115 : vector<8x1xi1> to vector<8x32xi1>
    %117 = arith.select %116, %99, %82 : vector<8x32xi1>, vector<8x32xf32>
    %118 = vector.extract_strided_slice %5 {offsets = [24, 0], sizes = [8, 128], strides = [1, 1]} : vector<64x128xf32> to vector<8x128xf32>
    %119 = arith.truncf %114 : vector<8x32xf32> to vector<8x32xbf16>
    %cst_28 = arith.constant dense<0.000000e+00> : vector<8x128xf32>
    %120 = tpu.matmul %119, %6, %cst_28 {dimension_numbers = #tpu.dot_dimension_numbers<[1], [0], [0], [1], [0, 0, 1, 1], [], []>} : vector<8x32xbf16>, vector<32x128xbf16>, vector<8x128xf32> -> vector<8x128xf32>
    %121 = arith.addf %118, %120 : vector<8x128xf32>
    %122 = arith.negf %121 : vector<8x128xf32>
    %123 = math.exp %122 : vector<8x128xf32>
    %cst_29 = arith.constant 1.000000e+00 : f32
    %124 = vector.broadcast %cst_29 : f32 to vector<8x128xf32>
    %125 = arith.addf %124, %123 : vector<8x128xf32>
    %126 = arith.divf %124, %125 : vector<8x128xf32>
    %127 = math.tanh %121 : vector<8x128xf32>
    %128 = vector.extract_strided_slice %126 {offsets = [0, 0], sizes = [8, 32], strides = [1, 1]} : vector<8x128xf32> to vector<8x32xf32>
    %129 = vector.extract_strided_slice %126 {offsets = [0, 32], sizes = [8, 32], strides = [1, 1]} : vector<8x128xf32> to vector<8x32xf32>
    %130 = vector.extract_strided_slice %127 {offsets = [0, 64], sizes = [8, 32], strides = [1, 1]} : vector<8x128xf32> to vector<8x32xf32>
    %131 = vector.extract_strided_slice %126 {offsets = [0, 96], sizes = [8, 32], strides = [1, 1]} : vector<8x128xf32> to vector<8x32xf32>
    %132 = arith.mulf %129, %117 : vector<8x32xf32>
    %133 = arith.mulf %128, %130 : vector<8x32xf32>
    %134 = arith.addf %132, %133 : vector<8x32xf32>
    %135 = math.tanh %134 : vector<8x32xf32>
    %136 = arith.mulf %131, %135 : vector<8x32xf32>
    %137 = vector.extract_strided_slice %7 {offsets = [24, 0], sizes = [8, 1], strides = [1, 1]} : vector<64x1xf32> to vector<8x1xf32>
    %cst_30 = arith.constant 0.000000e+00 : f32
    %138 = vector.broadcast %cst_30 : f32 to vector<8x1xf32>
    %139 = arith.cmpf ogt, %137, %138 : vector<8x1xf32>
    %cst_31 = arith.constant 0.000000e+00 : f32
    %140 = vector.shape_cast %139 : vector<8x1xi1> to vector<8x1xi1>
    %141 = vector.broadcast %140 : vector<8x1xi1> to vector<8x32xi1>
    %142 = vector.broadcast %cst_31 : f32 to vector<8x32xf32>
    %143 = arith.select %141, %136, %142 : vector<8x32xi1>, vector<8x32xf32>
    %144 = arith.mulf %143, %10 : vector<8x32xf32>
    %cst_32 = arith.constant dense<0.000000e+00> : vector<8xf32>
    %145 = vector.multi_reduction <add>, %144, %cst_32 [1] : vector<8x32xf32> to vector<8xf32>
    %146 = vector.shape_cast %145 : vector<8xf32> to vector<8x1xf32>
    %147 = vector.shape_cast %139 : vector<8x1xi1> to vector<8x1xi1>
    %148 = vector.broadcast %147 : vector<8x1xi1> to vector<8x32xi1>
    %149 = arith.select %148, %136, %114 : vector<8x32xi1>, vector<8x32xf32>
    %150 = vector.shape_cast %139 : vector<8x1xi1> to vector<8x1xi1>
    %151 = vector.broadcast %150 : vector<8x1xi1> to vector<8x32xi1>
    %152 = arith.select %151, %134, %117 : vector<8x32xi1>, vector<8x32xf32>
    %153 = vector.extract_strided_slice %5 {offsets = [32, 0], sizes = [8, 128], strides = [1, 1]} : vector<64x128xf32> to vector<8x128xf32>
    %154 = arith.truncf %149 : vector<8x32xf32> to vector<8x32xbf16>
    %cst_33 = arith.constant dense<0.000000e+00> : vector<8x128xf32>
    %155 = tpu.matmul %154, %6, %cst_33 {dimension_numbers = #tpu.dot_dimension_numbers<[1], [0], [0], [1], [0, 0, 1, 1], [], []>} : vector<8x32xbf16>, vector<32x128xbf16>, vector<8x128xf32> -> vector<8x128xf32>
    %156 = arith.addf %153, %155 : vector<8x128xf32>
    %157 = arith.negf %156 : vector<8x128xf32>
    %158 = math.exp %157 : vector<8x128xf32>
    %cst_34 = arith.constant 1.000000e+00 : f32
    %159 = vector.broadcast %cst_34 : f32 to vector<8x128xf32>
    %160 = arith.addf %159, %158 : vector<8x128xf32>
    %161 = arith.divf %159, %160 : vector<8x128xf32>
    %162 = math.tanh %156 : vector<8x128xf32>
    %163 = vector.extract_strided_slice %161 {offsets = [0, 0], sizes = [8, 32], strides = [1, 1]} : vector<8x128xf32> to vector<8x32xf32>
    %164 = vector.extract_strided_slice %161 {offsets = [0, 32], sizes = [8, 32], strides = [1, 1]} : vector<8x128xf32> to vector<8x32xf32>
    %165 = vector.extract_strided_slice %162 {offsets = [0, 64], sizes = [8, 32], strides = [1, 1]} : vector<8x128xf32> to vector<8x32xf32>
    %166 = vector.extract_strided_slice %161 {offsets = [0, 96], sizes = [8, 32], strides = [1, 1]} : vector<8x128xf32> to vector<8x32xf32>
    %167 = arith.mulf %164, %152 : vector<8x32xf32>
    %168 = arith.mulf %163, %165 : vector<8x32xf32>
    %169 = arith.addf %167, %168 : vector<8x32xf32>
    %170 = math.tanh %169 : vector<8x32xf32>
    %171 = arith.mulf %166, %170 : vector<8x32xf32>
    %172 = vector.extract_strided_slice %7 {offsets = [32, 0], sizes = [8, 1], strides = [1, 1]} : vector<64x1xf32> to vector<8x1xf32>
    %cst_35 = arith.constant 0.000000e+00 : f32
    %173 = vector.broadcast %cst_35 : f32 to vector<8x1xf32>
    %174 = arith.cmpf ogt, %172, %173 : vector<8x1xf32>
    %cst_36 = arith.constant 0.000000e+00 : f32
    %175 = vector.shape_cast %174 : vector<8x1xi1> to vector<8x1xi1>
    %176 = vector.broadcast %175 : vector<8x1xi1> to vector<8x32xi1>
    %177 = vector.broadcast %cst_36 : f32 to vector<8x32xf32>
    %178 = arith.select %176, %171, %177 : vector<8x32xi1>, vector<8x32xf32>
    %179 = arith.mulf %178, %10 : vector<8x32xf32>
    %cst_37 = arith.constant dense<0.000000e+00> : vector<8xf32>
    %180 = vector.multi_reduction <add>, %179, %cst_37 [1] : vector<8x32xf32> to vector<8xf32>
    %181 = vector.shape_cast %180 : vector<8xf32> to vector<8x1xf32>
    %182 = vector.shape_cast %174 : vector<8x1xi1> to vector<8x1xi1>
    %183 = vector.broadcast %182 : vector<8x1xi1> to vector<8x32xi1>
    %184 = arith.select %183, %171, %149 : vector<8x32xi1>, vector<8x32xf32>
    %185 = vector.shape_cast %174 : vector<8x1xi1> to vector<8x1xi1>
    %186 = vector.broadcast %185 : vector<8x1xi1> to vector<8x32xi1>
    %187 = arith.select %186, %169, %152 : vector<8x32xi1>, vector<8x32xf32>
    %188 = vector.extract_strided_slice %5 {offsets = [40, 0], sizes = [8, 128], strides = [1, 1]} : vector<64x128xf32> to vector<8x128xf32>
    %189 = arith.truncf %184 : vector<8x32xf32> to vector<8x32xbf16>
    %cst_38 = arith.constant dense<0.000000e+00> : vector<8x128xf32>
    %190 = tpu.matmul %189, %6, %cst_38 {dimension_numbers = #tpu.dot_dimension_numbers<[1], [0], [0], [1], [0, 0, 1, 1], [], []>} : vector<8x32xbf16>, vector<32x128xbf16>, vector<8x128xf32> -> vector<8x128xf32>
    %191 = arith.addf %188, %190 : vector<8x128xf32>
    %192 = arith.negf %191 : vector<8x128xf32>
    %193 = math.exp %192 : vector<8x128xf32>
    %cst_39 = arith.constant 1.000000e+00 : f32
    %194 = vector.broadcast %cst_39 : f32 to vector<8x128xf32>
    %195 = arith.addf %194, %193 : vector<8x128xf32>
    %196 = arith.divf %194, %195 : vector<8x128xf32>
    %197 = math.tanh %191 : vector<8x128xf32>
    %198 = vector.extract_strided_slice %196 {offsets = [0, 0], sizes = [8, 32], strides = [1, 1]} : vector<8x128xf32> to vector<8x32xf32>
    %199 = vector.extract_strided_slice %196 {offsets = [0, 32], sizes = [8, 32], strides = [1, 1]} : vector<8x128xf32> to vector<8x32xf32>
    %200 = vector.extract_strided_slice %197 {offsets = [0, 64], sizes = [8, 32], strides = [1, 1]} : vector<8x128xf32> to vector<8x32xf32>
    %201 = vector.extract_strided_slice %196 {offsets = [0, 96], sizes = [8, 32], strides = [1, 1]} : vector<8x128xf32> to vector<8x32xf32>
    %202 = arith.mulf %199, %187 : vector<8x32xf32>
    %203 = arith.mulf %198, %200 : vector<8x32xf32>
    %204 = arith.addf %202, %203 : vector<8x32xf32>
    %205 = math.tanh %204 : vector<8x32xf32>
    %206 = arith.mulf %201, %205 : vector<8x32xf32>
    %207 = vector.extract_strided_slice %7 {offsets = [40, 0], sizes = [8, 1], strides = [1, 1]} : vector<64x1xf32> to vector<8x1xf32>
    %cst_40 = arith.constant 0.000000e+00 : f32
    %208 = vector.broadcast %cst_40 : f32 to vector<8x1xf32>
    %209 = arith.cmpf ogt, %207, %208 : vector<8x1xf32>
    %cst_41 = arith.constant 0.000000e+00 : f32
    %210 = vector.shape_cast %209 : vector<8x1xi1> to vector<8x1xi1>
    %211 = vector.broadcast %210 : vector<8x1xi1> to vector<8x32xi1>
    %212 = vector.broadcast %cst_41 : f32 to vector<8x32xf32>
    %213 = arith.select %211, %206, %212 : vector<8x32xi1>, vector<8x32xf32>
    %214 = arith.mulf %213, %10 : vector<8x32xf32>
    %cst_42 = arith.constant dense<0.000000e+00> : vector<8xf32>
    %215 = vector.multi_reduction <add>, %214, %cst_42 [1] : vector<8x32xf32> to vector<8xf32>
    %216 = vector.shape_cast %215 : vector<8xf32> to vector<8x1xf32>
    %217 = vector.shape_cast %209 : vector<8x1xi1> to vector<8x1xi1>
    %218 = vector.broadcast %217 : vector<8x1xi1> to vector<8x32xi1>
    %219 = arith.select %218, %206, %184 : vector<8x32xi1>, vector<8x32xf32>
    %220 = vector.shape_cast %209 : vector<8x1xi1> to vector<8x1xi1>
    %221 = vector.broadcast %220 : vector<8x1xi1> to vector<8x32xi1>
    %222 = arith.select %221, %204, %187 : vector<8x32xi1>, vector<8x32xf32>
    %223 = vector.extract_strided_slice %5 {offsets = [48, 0], sizes = [8, 128], strides = [1, 1]} : vector<64x128xf32> to vector<8x128xf32>
    %224 = arith.truncf %219 : vector<8x32xf32> to vector<8x32xbf16>
    %cst_43 = arith.constant dense<0.000000e+00> : vector<8x128xf32>
    %225 = tpu.matmul %224, %6, %cst_43 {dimension_numbers = #tpu.dot_dimension_numbers<[1], [0], [0], [1], [0, 0, 1, 1], [], []>} : vector<8x32xbf16>, vector<32x128xbf16>, vector<8x128xf32> -> vector<8x128xf32>
    %226 = arith.addf %223, %225 : vector<8x128xf32>
    %227 = arith.negf %226 : vector<8x128xf32>
    %228 = math.exp %227 : vector<8x128xf32>
    %cst_44 = arith.constant 1.000000e+00 : f32
    %229 = vector.broadcast %cst_44 : f32 to vector<8x128xf32>
    %230 = arith.addf %229, %228 : vector<8x128xf32>
    %231 = arith.divf %229, %230 : vector<8x128xf32>
    %232 = math.tanh %226 : vector<8x128xf32>
    %233 = vector.extract_strided_slice %231 {offsets = [0, 0], sizes = [8, 32], strides = [1, 1]} : vector<8x128xf32> to vector<8x32xf32>
    %234 = vector.extract_strided_slice %231 {offsets = [0, 32], sizes = [8, 32], strides = [1, 1]} : vector<8x128xf32> to vector<8x32xf32>
    %235 = vector.extract_strided_slice %232 {offsets = [0, 64], sizes = [8, 32], strides = [1, 1]} : vector<8x128xf32> to vector<8x32xf32>
    %236 = vector.extract_strided_slice %231 {offsets = [0, 96], sizes = [8, 32], strides = [1, 1]} : vector<8x128xf32> to vector<8x32xf32>
    %237 = arith.mulf %234, %222 : vector<8x32xf32>
    %238 = arith.mulf %233, %235 : vector<8x32xf32>
    %239 = arith.addf %237, %238 : vector<8x32xf32>
    %240 = math.tanh %239 : vector<8x32xf32>
    %241 = arith.mulf %236, %240 : vector<8x32xf32>
    %242 = vector.extract_strided_slice %7 {offsets = [48, 0], sizes = [8, 1], strides = [1, 1]} : vector<64x1xf32> to vector<8x1xf32>
    %cst_45 = arith.constant 0.000000e+00 : f32
    %243 = vector.broadcast %cst_45 : f32 to vector<8x1xf32>
    %244 = arith.cmpf ogt, %242, %243 : vector<8x1xf32>
    %cst_46 = arith.constant 0.000000e+00 : f32
    %245 = vector.shape_cast %244 : vector<8x1xi1> to vector<8x1xi1>
    %246 = vector.broadcast %245 : vector<8x1xi1> to vector<8x32xi1>
    %247 = vector.broadcast %cst_46 : f32 to vector<8x32xf32>
    %248 = arith.select %246, %241, %247 : vector<8x32xi1>, vector<8x32xf32>
    %249 = arith.mulf %248, %10 : vector<8x32xf32>
    %cst_47 = arith.constant dense<0.000000e+00> : vector<8xf32>
    %250 = vector.multi_reduction <add>, %249, %cst_47 [1] : vector<8x32xf32> to vector<8xf32>
    %251 = vector.shape_cast %250 : vector<8xf32> to vector<8x1xf32>
    %252 = vector.shape_cast %244 : vector<8x1xi1> to vector<8x1xi1>
    %253 = vector.broadcast %252 : vector<8x1xi1> to vector<8x32xi1>
    %254 = arith.select %253, %241, %219 : vector<8x32xi1>, vector<8x32xf32>
    %255 = vector.shape_cast %244 : vector<8x1xi1> to vector<8x1xi1>
    %256 = vector.broadcast %255 : vector<8x1xi1> to vector<8x32xi1>
    %257 = arith.select %256, %239, %222 : vector<8x32xi1>, vector<8x32xf32>
    %258 = vector.extract_strided_slice %5 {offsets = [56, 0], sizes = [8, 128], strides = [1, 1]} : vector<64x128xf32> to vector<8x128xf32>
    %259 = arith.truncf %254 : vector<8x32xf32> to vector<8x32xbf16>
    %cst_48 = arith.constant dense<0.000000e+00> : vector<8x128xf32>
    %260 = tpu.matmul %259, %6, %cst_48 {dimension_numbers = #tpu.dot_dimension_numbers<[1], [0], [0], [1], [0, 0, 1, 1], [], []>} : vector<8x32xbf16>, vector<32x128xbf16>, vector<8x128xf32> -> vector<8x128xf32>
    %261 = arith.addf %258, %260 : vector<8x128xf32>
    %262 = arith.negf %261 : vector<8x128xf32>
    %263 = math.exp %262 : vector<8x128xf32>
    %cst_49 = arith.constant 1.000000e+00 : f32
    %264 = vector.broadcast %cst_49 : f32 to vector<8x128xf32>
    %265 = arith.addf %264, %263 : vector<8x128xf32>
    %266 = arith.divf %264, %265 : vector<8x128xf32>
    %267 = math.tanh %261 : vector<8x128xf32>
    %268 = vector.extract_strided_slice %266 {offsets = [0, 0], sizes = [8, 32], strides = [1, 1]} : vector<8x128xf32> to vector<8x32xf32>
    %269 = vector.extract_strided_slice %266 {offsets = [0, 32], sizes = [8, 32], strides = [1, 1]} : vector<8x128xf32> to vector<8x32xf32>
    %270 = vector.extract_strided_slice %267 {offsets = [0, 64], sizes = [8, 32], strides = [1, 1]} : vector<8x128xf32> to vector<8x32xf32>
    %271 = vector.extract_strided_slice %266 {offsets = [0, 96], sizes = [8, 32], strides = [1, 1]} : vector<8x128xf32> to vector<8x32xf32>
    %272 = arith.mulf %269, %257 : vector<8x32xf32>
    %273 = arith.mulf %268, %270 : vector<8x32xf32>
    %274 = arith.addf %272, %273 : vector<8x32xf32>
    %275 = math.tanh %274 : vector<8x32xf32>
    %276 = arith.mulf %271, %275 : vector<8x32xf32>
    %277 = vector.extract_strided_slice %7 {offsets = [56, 0], sizes = [8, 1], strides = [1, 1]} : vector<64x1xf32> to vector<8x1xf32>
    %cst_50 = arith.constant 0.000000e+00 : f32
    %278 = vector.broadcast %cst_50 : f32 to vector<8x1xf32>
    %279 = arith.cmpf ogt, %277, %278 : vector<8x1xf32>
    %cst_51 = arith.constant 0.000000e+00 : f32
    %280 = vector.shape_cast %279 : vector<8x1xi1> to vector<8x1xi1>
    %281 = vector.broadcast %280 : vector<8x1xi1> to vector<8x32xi1>
    %282 = vector.broadcast %cst_51 : f32 to vector<8x32xf32>
    %283 = arith.select %281, %276, %282 : vector<8x32xi1>, vector<8x32xf32>
    %284 = arith.mulf %283, %10 : vector<8x32xf32>
    %cst_52 = arith.constant dense<0.000000e+00> : vector<8xf32>
    %285 = vector.multi_reduction <add>, %284, %cst_52 [1] : vector<8x32xf32> to vector<8xf32>
    %286 = vector.shape_cast %285 : vector<8xf32> to vector<8x1xf32>
    %287 = arith.maximumf %41, %76 : vector<8x1xf32>
    %288 = arith.maximumf %287, %111 : vector<8x1xf32>
    %289 = arith.maximumf %288, %146 : vector<8x1xf32>
    %290 = arith.maximumf %289, %181 : vector<8x1xf32>
    %291 = arith.maximumf %290, %216 : vector<8x1xf32>
    %292 = arith.maximumf %291, %251 : vector<8x1xf32>
    %293 = arith.maximumf %292, %286 : vector<8x1xf32>
    %294 = arith.subf %41, %293 : vector<8x1xf32>
    %295 = math.exp %294 : vector<8x1xf32>
    %296 = arith.subf %76, %293 : vector<8x1xf32>
    %297 = math.exp %296 : vector<8x1xf32>
    %298 = arith.subf %111, %293 : vector<8x1xf32>
    %299 = math.exp %298 : vector<8x1xf32>
    %300 = arith.subf %146, %293 : vector<8x1xf32>
    %301 = math.exp %300 : vector<8x1xf32>
    %302 = arith.subf %181, %293 : vector<8x1xf32>
    %303 = math.exp %302 : vector<8x1xf32>
    %304 = arith.subf %216, %293 : vector<8x1xf32>
    %305 = math.exp %304 : vector<8x1xf32>
    %306 = arith.subf %251, %293 : vector<8x1xf32>
    %307 = math.exp %306 : vector<8x1xf32>
    %308 = arith.subf %286, %293 : vector<8x1xf32>
    %309 = math.exp %308 : vector<8x1xf32>
    %310 = arith.addf %295, %297 : vector<8x1xf32>
    %311 = arith.addf %310, %299 : vector<8x1xf32>
    %312 = arith.addf %311, %301 : vector<8x1xf32>
    %313 = arith.addf %312, %303 : vector<8x1xf32>
    %314 = arith.addf %313, %305 : vector<8x1xf32>
    %315 = arith.addf %314, %307 : vector<8x1xf32>
    %316 = arith.addf %315, %309 : vector<8x1xf32>
    %317 = vector.broadcast %295 : vector<8x1xf32> to vector<8x32xf32>
    %318 = arith.mulf %317, %38 : vector<8x32xf32>
    %319 = vector.broadcast %297 : vector<8x1xf32> to vector<8x32xf32>
    %320 = arith.mulf %319, %73 : vector<8x32xf32>
    %321 = arith.addf %318, %320 : vector<8x32xf32>
    %322 = vector.broadcast %299 : vector<8x1xf32> to vector<8x32xf32>
    %323 = arith.mulf %322, %108 : vector<8x32xf32>
    %324 = arith.addf %321, %323 : vector<8x32xf32>
    %325 = vector.broadcast %301 : vector<8x1xf32> to vector<8x32xf32>
    %326 = arith.mulf %325, %143 : vector<8x32xf32>
    %327 = arith.addf %324, %326 : vector<8x32xf32>
    %328 = vector.broadcast %303 : vector<8x1xf32> to vector<8x32xf32>
    %329 = arith.mulf %328, %178 : vector<8x32xf32>
    %330 = arith.addf %327, %329 : vector<8x32xf32>
    %331 = vector.broadcast %305 : vector<8x1xf32> to vector<8x32xf32>
    %332 = arith.mulf %331, %213 : vector<8x32xf32>
    %333 = arith.addf %330, %332 : vector<8x32xf32>
    %334 = vector.broadcast %307 : vector<8x1xf32> to vector<8x32xf32>
    %335 = arith.mulf %334, %248 : vector<8x32xf32>
    %336 = arith.addf %333, %335 : vector<8x32xf32>
    %337 = vector.broadcast %309 : vector<8x1xf32> to vector<8x32xf32>
    %338 = arith.mulf %337, %283 : vector<8x32xf32>
    %339 = arith.addf %336, %338 : vector<8x32xf32>
    %340 = tpu.reciprocal %316 {approx = true} : vector<8x1xf32> -> vector<8x1xf32>
    %341 = vector.broadcast %340 : vector<8x1xf32> to vector<8x32xf32>
    %342 = arith.mulf %339, %341 : vector<8x32xf32>
    %c0_53 = arith.constant 0 : index
    %c0_54 = arith.constant 0 : index
    %343 = vector.load %arg6[%c0_53, %c0_54] : memref<32x128xf32, #tpu.memory_space<vmem>>, vector<32x128xf32>
    %cst_55 = arith.constant dense<0.000000e+00> : vector<8x128xf32>
    %344 = tpu.matmul %342, %343, %cst_55 {dimension_numbers = #tpu.dot_dimension_numbers<[1], [0], [0], [1], [0, 0, 1, 1], [], []>} : vector<8x32xf32>, vector<32x128xf32>, vector<8x128xf32> -> vector<8x128xf32>
    %c0_56 = arith.constant 0 : index
    %c0_57 = arith.constant 0 : index
    %345 = vector.load %arg7[%c0_56, %c0_57] : memref<1x128xf32, #tpu.memory_space<vmem>>, vector<1x128xf32>
    %346 = vector.broadcast %345 : vector<1x128xf32> to vector<8x128xf32>
    %347 = arith.addf %344, %346 : vector<8x128xf32>
    %c0_58 = arith.constant 0 : index
    %c0_59 = arith.constant 0 : index
    %348 = vector.load %arg8[%c0_58, %c0_59] : memref<8x128xf32, #tpu.memory_space<vmem>>, vector<8x128xf32>
    tpu.vector_store %arg8[%c0_58, %c0_59], %347 {strides = array<i32>} : memref<8x128xf32, #tpu.memory_space<vmem>>, vector<8x128xf32>,
    return
  }
}

</mosaic_0001>

<llo_original>
// kernel: tpu_custom_call.1
$region0: #{tpu_custom_call.1}
  #allocation0 [shape = 'u32[]', space=smem, size = 0x4, offset = 0x4, fixed_abs, tag = 'smem constant byte address 0x4 - core index']
  #allocation1 [shape = 'u32[144,128]{1,0:T(1,128)}', space=vmem, size = 0x12000, scoped, tag = 'internal scratch']
  %s0 = inlined_call_operand.vmem [shape: bf16[64,64], index: 0, kind: input, shape index: {}]
  %s1 = inlined_call_operand.vmem [shape: f32[64,1], index: 1, kind: input, shape index: {}]
  %s2 = inlined_call_operand.vmem [shape: bf16[64,128], index: 2, kind: input, shape index: {}]
  %s3 = inlined_call_operand.hbm [shape: bf16[32,128], index: 3, kind: input, shape index: {}]
  %s4 = inlined_call_operand.vmem [shape: f32[1,128], index: 4, kind: input, shape index: {}]
  %s5 = inlined_call_operand.vmem [shape: f32[1,32], index: 5, kind: input, shape index: {}]
  %s6 = inlined_call_operand.hbm [shape: f32[32,128], index: 6, kind: input, shape index: {}]
  %s7 = inlined_call_operand.vmem [shape: f32[1,128], index: 7, kind: input, shape index: {}]
  %s8 = inlined_call_operand.hbm [shape: f32[8,128], index: 8, kind: output, shape index: {}]
  %s9 = sld [smem:[#allocation0]]
  $region50: #{tpu_custom_call.1} parent=0
    _
  %s11 = ssub.s32 1, %s9
  %s12 = scalar_select 0, %s11, %s9
  $region1: #{tpu_custom_call.1} parent=0
    #allocation2 [shape = 'u8[8192]{0}', space=vmem, size = 0x2000, scoped, tag = 'input window, operand 3, single buffered']
    #allocation3 [shape = 's32[1]{0}', space=sflag, size = 0x4, scoped, tag = 'scoped memory for tpu_custom_call.1']
    #allocation4 [shape = 's32[1]{0}', space=sflag, size = 0x4, scoped, tag = 'scoped memory for tpu_custom_call.1']
    #allocation5 [shape = 'u8[16384]{0}', space=vmem, size = 0x4000, scoped, tag = 'input window, operand 6, single buffered']
    #allocation6 [shape = 's32[1]{0}', space=sflag, size = 0x4, scoped, tag = 'scoped memory for tpu_custom_call.1']
    #allocation7 [shape = 'u8[4096]{0}', space=vmem, size = 0x1000, scoped, tag = 'output window, operand 0, single buffered']
    %13 = vsyncpa [#allocation3], 0
    %14 = vsyncpa [#allocation6], 0
    %15 = vsyncpa [#allocation4], 0
    // Predicated region
    $region2: #{tpu_custom_call.1} parent=1 // pred_check
      _
    $region3: #{tpu_custom_call.1} parent=1 // pred_check_branch
      %17 = sbr.rel (0) target = $region5
    $region4: #{tpu_custom_call.1} parent=1 // pred_region
      _
    $region5: #{tpu_custom_call.1} parent=1 // pred_fallthru
      _
    // Predicated region
    $region6: #{tpu_custom_call.1} parent=1 // pred_check
      _
    $region7: #{tpu_custom_call.1} parent=1 // pred_check_branch
      %19 = sbr.rel (0) target = $region9
    $region8: #{tpu_custom_call.1} parent=1 // pred_region
      _
    $region9: #{tpu_custom_call.1} parent=1 // pred_fallthru
      _
    // Predicated region
    $region10: #{tpu_custom_call.1} parent=1 // pred_check
      _
    $region11: #{tpu_custom_call.1} parent=1 // pred_check_branch
      %21 = sbr.rel (0) target = $region13
    $region12: #{tpu_custom_call.1} parent=1 // pred_region
      _
    $region13: #{tpu_custom_call.1} parent=1 // pred_fallthru
      _
    // Predicated region
    $region14: #{tpu_custom_call.1} parent=1 // pred_check
      _
    $region15: #{tpu_custom_call.1} parent=1 // pred_check_branch
      %23 = sbr.rel (0) target = $region17
    $region16: #{tpu_custom_call.1} parent=1 // pred_region
      %s25 = ssub.s32 256, 256
      %26 = vsyncadd [#allocation3], %s25
      %s27 = sshll.u32 [#allocation2], 4
      %s28 = int_to_ptr.vmem [resolvable:$true] %s27
      %33 = dma.hbm_to_vmem [thread:$0]  %s3, 256, %s28, [#allocation3], 64, 64, 4
    $region17: #{tpu_custom_call.1} parent=1 // pred_fallthru
      _
    // Predicated region
    $region18: #{tpu_custom_call.1} parent=1 // pred_check
      _
    $region19: #{tpu_custom_call.1} parent=1 // pred_check_branch
      %35 = sbr.rel (0) target = $region21
    $region20: #{tpu_custom_call.1} parent=1 // pred_region
      _
    $region21: #{tpu_custom_call.1} parent=1 // pred_fallthru
      _
    // Predicated region
    $region22: #{tpu_custom_call.1} parent=1 // pred_check
      _
    $region23: #{tpu_custom_call.1} parent=1 // pred_check_branch
      %37 = sbr.rel (0) target = $region25
    $region24: #{tpu_custom_call.1} parent=1 // pred_region
      _
    $region25: #{tpu_custom_call.1} parent=1 // pred_fallthru
      _
    // Predicated region
    $region26: #{tpu_custom_call.1} parent=1 // pred_check
      _
    $region27: #{tpu_custom_call.1} parent=1 // pred_check_branch
      %39 = sbr.rel (0) target = $region29
    $region28: #{tpu_custom_call.1} parent=1 // pred_region
      %s41 = ssub.s32 512, 512
      %42 = vsyncadd [#allocation6], %s41
      %s43 = sshll.u32 [#allocation5], 4
      %s44 = int_to_ptr.vmem [resolvable:$true] %s43
      %49 = dma.hbm_to_vmem [thread:$0]  %s6, 512, %s44, [#allocation6], 128, 128, 8
    $region29: #{tpu_custom_call.1} parent=1 // pred_fallthru
      _
    // Predicated region
    $region30: #{tpu_custom_call.1} parent=1 // pred_check
      _
    $region31: #{tpu_custom_call.1} parent=1 // pred_check_branch
      %51 = sbr.rel (0) target = $region33
    $region32: #{tpu_custom_call.1} parent=1 // pred_region
      _
    $region33: #{tpu_custom_call.1} parent=1 // pred_fallthru
      _
    // Predicated region
    $region34: #{tpu_custom_call.1} parent=1 // pred_check
      _
    $region35: #{tpu_custom_call.1} parent=1 // pred_check_branch
      %53 = sbr.rel (0) target = $region37
    $region36: #{tpu_custom_call.1} parent=1 // pred_region
      %54 = dma.done [#allocation3], 256
    $region37: #{tpu_custom_call.1} parent=1 // pred_fallthru
      _
    // Predicated region
    $region38: #{tpu_custom_call.1} parent=1 // pred_check
      _
    $region39: #{tpu_custom_call.1} parent=1 // pred_check_branch
      %56 = sbr.rel (0) target = $region41
    $region40: #{tpu_custom_call.1} parent=1 // pred_region
      %57 = dma.done [#allocation6], 512
    $region41: #{tpu_custom_call.1} parent=1 // pred_fallthru
      _
    %v59 = vld [vmem:[%s0] sm:$0xf]
    %v60 = vld [vmem:[%s0 + $0x4] sm:$0xf]
    %v61 = vld [vmem:[%s0 + $0x8] sm:$0xf]
    %v62 = vld [vmem:[%s0 + $0xc] sm:$0xf]
    %v63 = vld [vmem:[%s0 + $0x10] sm:$0xf]
    %v64 = vld [vmem:[%s0 + $0x14] sm:$0xf]
    %v65 = vld [vmem:[%s0 + $0x18] sm:$0xf]
    %v66 = vld [vmem:[%s0 + $0x1c] sm:$0xf]
    %v67 = vld [vmem:[%s2] sm:$0xf]
    %v68 = vld [vmem:[%s2 + $0x4] sm:$0xf]
    %v69 = vld [vmem:[%s2 + $0x8] sm:$0xf]
    %v70 = vld [vmem:[%s2 + $0xc] sm:$0xf]
    %v71 = vld [vmem:[%s2 + $0x10] sm:$0xf]
    %v72 = vld [vmem:[%s2 + $0x14] sm:$0xf]
    %v73 = vld [vmem:[%s2 + $0x18] sm:$0xf]
    %v74 = vld [vmem:[%s2 + $0x1c] sm:$0xf]
    %v75 = vld [vmem:[%s4] sm:$0x1]
    %v77 = vlaneseq
    %v78 = vshrl.u32 %v77, 7
    %v79 = vsub.s32 0, %v78
    %v80 = vrot.slane %v75, %v79
    %v90 = vunpack.c.l.b16 %v59
    %v91 = vunpack.c.l.b16 %v60
    %v92 = vunpack.c.l.b16 %v61
    %v93 = vunpack.c.l.b16 %v62
    %v94 = vunpack.c.l.b16 %v63
    %v95 = vunpack.c.l.b16 %v64
    %v96 = vunpack.c.l.b16 %v65
    %v97 = vunpack.c.l.b16 %v66
    %v98 = vpack.c.b16 %v91, %v90
    %v99 = vpack.c.b16 %v93, %v92
    %v100 = vpack.c.b16 %v95, %v94
    %v101 = vpack.c.b16 %v97, %v96
    %v110 = vunpack.c.l.b16 %v67
    %v111 = vunpack.c.l.b16 %v68
    %v112 = vunpack.c.l.b16 %v69
    %v113 = vunpack.c.l.b16 %v70
    %v114 = vunpack.c.l.b16 %v71
    %v115 = vunpack.c.l.b16 %v72
    %v116 = vunpack.c.l.b16 %v73
    %v117 = vunpack.c.l.b16 %v74
    %v118 = vpack.c.b16 %v111, %v110
    %v119 = vpack.c.b16 %v113, %v112
    %v120 = vpack.c.b16 %v115, %v114
    %v121 = vpack.c.b16 %v117, %v116
    %vm126 = vcmask 523264
    %v128 = vsel %vm126, %v98, 0
    %v131 = vsel %vm126, %v99, 0
    %v134 = vsel %vm126, %v100, 0
    %v137 = vsel %vm126, %v101, 0
    %139 = vmatprep.subr.bf16.mxu0 0
    %140 = vmatpush1.bf16.msra.mxu0 %v118
    %141 = vmatprep.subr.bf16.mxu0 0
    %142 = vmatpush1.bf16.msra.mxu0 %v119
    %143 = vmatprep.subr.bf16.mxu0 0
    %144 = vmatpush1.bf16.msra.mxu0 %v120
    %145 = vmatprep.subr.bf16.mxu0 0
    %146 = vmatpush1.bf16.msra.mxu0 %v121
    %147 = vmatprep.subr.bf16.mxu0 0
    %148 = vmatpush1.bf16.msra.mxu0 0
    %149 = vmatprep.subr.bf16.mxu0 0
    %150 = vmatpush1.bf16.msra.mxu0 0
    %151 = vmatprep.subr.bf16.mxu0 0
    %152 = vmatpush1.bf16.msra.mxu0 0
    %153 = vmatprep.subr.bf16.mxu0 0
    %154 = vmatpush1.bf16.msra.mxu0 0
    %155 = vmatprep.subr.bf16.mxu0 0
    %156 = vmatpush1.bf16.msra.mxu0 0
    %157 = vmatprep.subr.bf16.mxu0 0
    %158 = vmatpush1.bf16.msra.mxu0 0
    %159 = vmatprep.subr.bf16.mxu0 0
    %160 = vmatpush1.bf16.msra.mxu0 0
    %161 = vmatprep.subr.bf16.mxu0 0
    %162 = vmatpush1.bf16.msra.mxu0 0
    %163 = vmatprep.subr.bf16.mxu0 0
    %164 = vmatpush1.bf16.msra.mxu0 0
    %165 = vmatprep.subr.bf16.mxu0 0
    %166 = vmatpush1.bf16.msra.mxu0 0
    %167 = vmatprep.subr.bf16.mxu0 0
    %168 = vmatpush1.bf16.msra.mxu0 0
    %169 = vmatprep.subr.bf16.mxu0 0
    %170 = vmatpush1.bf16.msra.mxu0 0
    %171 = vmatprep.mubr.bf16.mxu0 0
    %172 = vmatmul.mubr.bf16.gmra.mrb[0].mxu0 %v128
    %v173 = vpop.f32.mrb[0].mxu0
    %v174 = vadd.f32 %v80, %v173
    %v175 = vpop.f32.mrb[0].mxu0
    %v176 = vpop.f32.mrb[0].mxu0
    %v177 = vadd.f32 %v80, %v176
    %v178 = vpop.f32.mrb[0].mxu0
    %179 = vmatprep.mubr.bf16.mxu0 0
    %180 = vmatmul.mubr.bf16.gmra.mrb[0].mxu0 %v131
    %v181 = vpop.f32.mrb[0].mxu0
    %v182 = vadd.f32 %v80, %v181
    %v183 = vpop.f32.mrb[0].mxu0
    %v184 = vpop.f32.mrb[0].mxu0
    %v185 = vadd.f32 %v80, %v184
    %v186 = vpop.f32.mrb[0].mxu0
    %187 = vmatprep.mubr.bf16.mxu0 0
    %188 = vmatmul.mubr.bf16.gmra.mrb[0].mxu0 %v134
    %v189 = vpop.f32.mrb[0].mxu0
    %v190 = vadd.f32 %v80, %v189
    %v191 = vpop.f32.mrb[0].mxu0
    %v192 = vpop.f32.mrb[0].mxu0
    %v193 = vadd.f32 %v80, %v192
    %v194 = vpop.f32.mrb[0].mxu0
    %195 = vmatprep.mubr.bf16.mxu0 0
    %196 = vmatmul.mubr.bf16.gmra.mrb[0].mxu0 %v137
    %v197 = vpop.f32.mrb[0].mxu0
    %v198 = vadd.f32 %v80, %v197
    %v199 = vpop.f32.mrb[0].mxu0
    %v200 = vpop.f32.mrb[0].mxu0
    %v201 = vadd.f32 %v80, %v200
    %v202 = vpop.f32.mrb[0].mxu0
    %203 = vdwg.mxu0
    %v204 = vld [vmem:[#allocation2] sm:$0xf]
    %v205 = vld [vmem:[#allocation2 + $0x4] sm:$0xf]
    %v206 = vld [vmem:[#allocation2 + $0x8] sm:$0xf]
    %v207 = vld [vmem:[#allocation2 + $0xc] sm:$0xf]
    %v208 = vld [vmem:[%s1] sm:$0xff]
    %v209 = vld [vmem:[%s1 + $0x8] sm:$0xff]
    %v210 = vld [vmem:[%s1 + $0x10] sm:$0xff]
    %v211 = vld [vmem:[%s1 + $0x18] sm:$0xff]
    %v212 = vld [vmem:[%s1 + $0x20] sm:$0xff]
    %v213 = vld [vmem:[%s1 + $0x28] sm:$0xff]
    %v214 = vld [vmem:[%s1 + $0x30] sm:$0xff]
    %v215 = vld [vmem:[%s1 + $0x38] sm:$0xff]
    %v216 = vld [vmem:[%s5] sm:$0x1]
    %v218 = vlaneseq
    %v219 = vshrl.u32 %v218, 7
    %v220 = vsub.s32 0, %v219
    %v221 = vrot.slane %v216, %v220
    %v226 = vunpack.c.l.b16 %v204
    %v227 = vunpack.c.l.b16 %v205
    %v228 = vunpack.c.l.b16 %v206
    %v229 = vunpack.c.l.b16 %v207
    %v230 = vpack.c.b16 %v227, %v226
    %v231 = vpack.c.b16 %v229, %v228
    %vm234 = vcmask 261120
    %v236 = vsel %vm234, 0, 0
    %238 = vmatprep.subr.bf16.mxu0 0
    %239 = vmatpush1.bf16.msra.mxu0 %v230
    %240 = vmatprep.subr.bf16.mxu0 0
    %241 = vmatpush1.bf16.msra.mxu0 %v231
    %242 = vmatprep.subr.bf16.mxu0 0
    %243 = vmatpush1.bf16.msra.mxu0 0
    %244 = vmatprep.subr.bf16.mxu0 0
    %245 = vmatpush1.bf16.msra.mxu0 0
    %246 = vmatprep.subr.bf16.mxu0 0
    %247 = vmatpush1.bf16.msra.mxu0 0
    %248 = vmatprep.subr.bf16.mxu0 0
    %249 = vmatpush1.bf16.msra.mxu0 0
    %250 = vmatprep.subr.bf16.mxu0 0
    %251 = vmatpush1.bf16.msra.mxu0 0
    %252 = vmatprep.subr.bf16.mxu0 0
    %253 = vmatpush1.bf16.msra.mxu0 0
    %254 = vmatprep.subr.bf16.mxu0 0
    %255 = vmatpush1.bf16.msra.mxu0 0
    %256 = vmatprep.subr.bf16.mxu0 0
    %257 = vmatpush1.bf16.msra.mxu0 0
    %258 = vmatprep.subr.bf16.mxu0 0
    %259 = vmatpush1.bf16.msra.mxu0 0
    %260 = vmatprep.subr.bf16.mxu0 0
    %261 = vmatpush1.bf16.msra.mxu0 0
    %262 = vmatprep.subr.bf16.mxu0 0
    %263 = vmatpush1.bf16.msra.mxu0 0
    %264 = vmatprep.subr.bf16.mxu0 0
    %265 = vmatpush1.bf16.msra.mxu0 0
    %266 = vmatprep.subr.bf16.mxu0 0
    %267 = vmatpush1.bf16.msra.mxu0 0
    %268 = vmatprep.subr.bf16.mxu0 0
    %269 = vmatpush1.bf16.msra.mxu0 0
    %270 = vmatprep.mubr.bf16.mxu0 0
    %271 = vmatmul.mubr.bf16.gmra.mrb[0].mxu0 %v236
    %v272 = vpop.f32.mrb[0].mxu0
    %v273 = vadd.f32 0.0, %v272
    %v274 = vpop.f32.mrb[0].mxu0
    %v275 = vpop.f32.mrb[0].mxu0
    %v276 = vpop.f32.mrb[0].mxu0
    %277 = vdwg.mxu0
    %v278 = vadd.f32 %v174, %v273
    %v279 = vxor.u32 %v278, 2147483648
    %v280 = vmul.f32 %v279, 1.442695
    %v281 = vpow.pop %v280
    %v282 = vadd.f32 %v281, 1.0
    %v283 = vrcp.pop %v282
    %v284 = vmul.f32 1.0, %v283
    %v285 = vtanh.pop %v278
    %v286 = vmul.f32 %v284, 0.0
    %288 = vrot.lane.b32.xlu0 %v285, 64
    %v289 = vpop.permute.xlu0 %288
    %v291 = vmul.f32 %v284, %v289
    %293 = vrot.lane.b32.xlu0 %v291, 32
    %v294 = vpop.permute.xlu0 %293
    %v296 = vadd.f32 %v286, %v294
    %v297 = vtanh.pop %v296
    %299 = vrot.lane.b32.xlu0 %v297, 64
    %v300 = vpop.permute.xlu0 %299
    %v302 = vmul.f32 %v284, %v300
    %vm303 = vcmp.gt.f32.partialorder %v208, 0.0
    %v304 = vsel %vm303, 1, 0
    %305 = vset.pattern.permute.xlu0 0
    %306 = vperm.xlu0 %305, %v304
    %v307 = vpop.permute.xlu0 %306
    %vm308 = vcmp.eq.s32.totalorder %v307, 1
    %v309 = vsel %vm308, %v302, 0.0
    %310 = vrot.lane.b32.xlu0 %v221, 96
    %v311 = vpop.permute.xlu0 %310
    %v313 = vmul.f32 %v309, %v311
    %315 = vrot.lane.b32.xlu0 %v313, 32
    %v316 = vpop.permute.xlu0 %315
    %v318 = vsel %vm234, %v316, 0.0
    %319 = vadd.xlane.f32.xlu0 %v318
    %v320 = vpop.xlane.xlu0 %319
    %v321 = vsel %vm308, %v296, 0.0
    %v322 = vpack.c.bf16 %v309, %v309
    %324 = vrot.lane.b32.xlu0 %v322, 32
    %v325 = vpop.permute.xlu0 %324
    %v327 = vsel %vm234, %v325, 0
    %329 = vmatprep.subr.bf16.mxu0 0
    %330 = vmatpush1.bf16.msra.mxu0 %v230
    %331 = vmatprep.subr.bf16.mxu0 0
    %332 = vmatpush1.bf16.msra.mxu0 %v231
    %333 = vmatprep.subr.bf16.mxu0 0
    %334 = vmatpush1.bf16.msra.mxu0 0
    %335 = vmatprep.subr.bf16.mxu0 0
    %336 = vmatpush1.bf16.msra.mxu0 0
    %337 = vmatprep.subr.bf16.mxu0 0
    %338 = vmatpush1.bf16.msra.mxu0 0
    %339 = vmatprep.subr.bf16.mxu0 0
    %340 = vmatpush1.bf16.msra.mxu0 0
    %341 = vmatprep.subr.bf16.mxu0 0
    %342 = vmatpush1.bf16.msra.mxu0 0
    %343 = vmatprep.subr.bf16.mxu0 0
    %344 = vmatpush1.bf16.msra.mxu0 0
    %345 = vmatprep.subr.bf16.mxu0 0
    %346 = vmatpush1.bf16.msra.mxu0 0
    %347 = vmatprep.subr.bf16.mxu0 0
    %348 = vmatpush1.bf16.msra.mxu0 0
    %349 = vmatprep.subr.bf16.mxu0 0
    %350 = vmatpush1.bf16.msra.mxu0 0
    %351 = vmatprep.subr.bf16.mxu0 0
    %352 = vmatpush1.bf16.msra.mxu0 0
    %353 = vmatprep.subr.bf16.mxu0 0
    %354 = vmatpush1.bf16.msra.mxu0 0
    %355 = vmatprep.subr.bf16.mxu0 0
    %356 = vmatpush1.bf16.msra.mxu0 0
    %357 = vmatprep.subr.bf16.mxu0 0
    %358 = vmatpush1.bf16.msra.mxu0 0
    %359 = vmatprep.subr.bf16.mxu0 0
    %360 = vmatpush1.bf16.msra.mxu0 0
    %361 = vmatprep.mubr.bf16.mxu0 0
    %362 = vmatmul.mubr.bf16.gmra.mrb[0].mxu0 %v327
    %v363 = vpop.f32.mrb[0].mxu0
    %v364 = vadd.f32 0.0, %v363
    %v365 = vpop.f32.mrb[0].mxu0
    %v366 = vpop.f32.mrb[0].mxu0
    %v367 = vpop.f32.mrb[0].mxu0
    %368 = vdwg.mxu0
    %v369 = vadd.f32 %v177, %v364
    %v370 = vxor.u32 %v369, 2147483648
    %v371 = vmul.f32 %v370, 1.442695
    %v372 = vpow.pop %v371
    %v373 = vadd.f32 %v372, 1.0
    %v374 = vrcp.pop %v373
    %v375 = vmul.f32 1.0, %v374
    %v376 = vtanh.pop %v369
    %v377 = vmul.f32 %v375, %v321
    %379 = vrot.lane.b32.xlu0 %v376, 64
    %v380 = vpop.permute.xlu0 %379
    %v382 = vmul.f32 %v375, %v380
    %384 = vrot.lane.b32.xlu0 %v382, 32
    %v385 = vpop.permute.xlu0 %384
    %v387 = vadd.f32 %v377, %v385
    %v388 = vtanh.pop %v387
    %390 = vrot.lane.b32.xlu0 %v388, 64
    %v391 = vpop.permute.xlu0 %390
    %v393 = vmul.f32 %v375, %v391
    %vm394 = vcmp.gt.f32.partialorder %v209, 0.0
    %v395 = vsel %vm394, 1, 0
    %396 = vset.pattern.permute.xlu0 0
    %397 = vperm.xlu0 %396, %v395
    %v398 = vpop.permute.xlu0 %397
    %vm399 = vcmp.eq.s32.totalorder %v398, 1
    %v400 = vsel %vm399, %v393, 0.0
    %v401 = vmul.f32 %v400, %v311
    %403 = vrot.lane.b32.xlu0 %v401, 32
    %v404 = vpop.permute.xlu0 %403
    %v406 = vsel %vm234, %v404, 0.0
    %407 = vadd.xlane.f32.xlu0 %v406
    %v408 = vpop.xlane.xlu0 %407
    %v409 = vsel %vm399, %v393, %v309
    %v410 = vsel %vm399, %v387, %v321
    %v411 = vpack.c.bf16 %v409, %v409
    %413 = vrot.lane.b32.xlu0 %v411, 32
    %v414 = vpop.permute.xlu0 %413
    %v416 = vsel %vm234, %v414, 0
    %418 = vmatprep.subr.bf16.mxu0 0
    %419 = vmatpush1.bf16.msra.mxu0 %v230
    %420 = vmatprep.subr.bf16.mxu0 0
    %421 = vmatpush1.bf16.msra.mxu0 %v231
    %422 = vmatprep.subr.bf16.mxu0 0
    %423 = vmatpush1.bf16.msra.mxu0 0
    %424 = vmatprep.subr.bf16.mxu0 0
    %425 = vmatpush1.bf16.msra.mxu0 0
    %426 = vmatprep.subr.bf16.mxu0 0
    %427 = vmatpush1.bf16.msra.mxu0 0
    %428 = vmatprep.subr.bf16.mxu0 0
    %429 = vmatpush1.bf16.msra.mxu0 0
    %430 = vmatprep.subr.bf16.mxu0 0
    %431 = vmatpush1.bf16.msra.mxu0 0
    %432 = vmatprep.subr.bf16.mxu0 0
    %433 = vmatpush1.bf16.msra.mxu0 0
    %434 = vmatprep.subr.bf16.mxu0 0
    %435 = vmatpush1.bf16.msra.mxu0 0
    %436 = vmatprep.subr.bf16.mxu0 0
    %437 = vmatpush1.bf16.msra.mxu0 0
    %438 = vmatprep.subr.bf16.mxu0 0
    %439 = vmatpush1.bf16.msra.mxu0 0
    %440 = vmatprep.subr.bf16.mxu0 0
    %441 = vmatpush1.bf16.msra.mxu0 0
    %442 = vmatprep.subr.bf16.mxu0 0
    %443 = vmatpush1.bf16.msra.mxu0 0
    %444 = vmatprep.subr.bf16.mxu0 0
    %445 = vmatpush1.bf16.msra.mxu0 0
    %446 = vmatprep.subr.bf16.mxu0 0
    %447 = vmatpush1.bf16.msra.mxu0 0
    %448 = vmatprep.subr.bf16.mxu0 0
    %449 = vmatpush1.bf16.msra.mxu0 0
    %450 = vmatprep.mubr.bf16.mxu0 0
    %451 = vmatmul.mubr.bf16.gmra.mrb[0].mxu0 %v416
    %v452 = vpop.f32.mrb[0].mxu0
    %v453 = vadd.f32 0.0, %v452
    %v454 = vpop.f32.mrb[0].mxu0
    %v455 = vpop.f32.mrb[0].mxu0
    %v456 = vpop.f32.mrb[0].mxu0
    %457 = vdwg.mxu0
    %v458 = vadd.f32 %v182, %v453
    %v459 = vxor.u32 %v458, 2147483648
    %v460 = vmul.f32 %v459, 1.442695
    %v461 = vpow.pop %v460
    %v462 = vadd.f32 %v461, 1.0
    %v463 = vrcp.pop %v462
    %v464 = vmul.f32 1.0, %v463
    %v465 = vtanh.pop %v458
    %v466 = vmul.f32 %v464, %v410
    %468 = vrot.lane.b32.xlu0 %v465, 64
    %v469 = vpop.permute.xlu0 %468
    %v471 = vmul.f32 %v464, %v469
    %473 = vrot.lane.b32.xlu0 %v471, 32
    %v474 = vpop.permute.xlu0 %473
    %v476 = vadd.f32 %v466, %v474
    %v477 = vtanh.pop %v476
    %479 = vrot.lane.b32.xlu0 %v477, 64
    %v480 = vpop.permute.xlu0 %479
    %v482 = vmul.f32 %v464, %v480
    %vm483 = vcmp.gt.f32.partialorder %v210, 0.0
    %v484 = vsel %vm483, 1, 0
    %485 = vset.pattern.permute.xlu0 0
    %486 = vperm.xlu0 %485, %v484
    %v487 = vpop.permute.xlu0 %486
    %vm488 = vcmp.eq.s32.totalorder %v487, 1
    %v489 = vsel %vm488, %v482, 0.0
    %v490 = vmul.f32 %v489, %v311
    %492 = vrot.lane.b32.xlu0 %v490, 32
    %v493 = vpop.permute.xlu0 %492
    %v495 = vsel %vm234, %v493, 0.0
    %496 = vadd.xlane.f32.xlu0 %v495
    %v497 = vpop.xlane.xlu0 %496
    %v498 = vsel %vm488, %v482, %v409
    %v499 = vsel %vm488, %v476, %v410
    %v500 = vpack.c.bf16 %v498, %v498
    %502 = vrot.lane.b32.xlu0 %v500, 32
    %v503 = vpop.permute.xlu0 %502
    %v505 = vsel %vm234, %v503, 0
    %507 = vmatprep.subr.bf16.mxu0 0
    %508 = vmatpush1.bf16.msra.mxu0 %v230
    %509 = vmatprep.subr.bf16.mxu0 0
    %510 = vmatpush1.bf16.msra.mxu0 %v231
    %511 = vmatprep.subr.bf16.mxu0 0
    %512 = vmatpush1.bf16.msra.mxu0 0
    %513 = vmatprep.subr.bf16.mxu0 0
    %514 = vmatpush1.bf16.msra.mxu0 0
    %515 = vmatprep.subr.bf16.mxu0 0
    %516 = vmatpush1.bf16.msra.mxu0 0
    %517 = vmatprep.subr.bf16.mxu0 0
    %518 = vmatpush1.bf16.msra.mxu0 0
    %519 = vmatprep.subr.bf16.mxu0 0
    %520 = vmatpush1.bf16.msra.mxu0 0
    %521 = vmatprep.subr.bf16.mxu0 0
    %522 = vmatpush1.bf16.msra.mxu0 0
    %523 = vmatprep.subr.bf16.mxu0 0
    %524 = vmatpush1.bf16.msra.mxu0 0
    %525 = vmatprep.subr.bf16.mxu0 0
    %526 = vmatpush1.bf16.msra.mxu0 0
    %527 = vmatprep.subr.bf16.mxu0 0
    %528 = vmatpush1.bf16.msra.mxu0 0
    %529 = vmatprep.subr.bf16.mxu0 0
    %530 = vmatpush1.bf16.msra.mxu0 0
    %531 = vmatprep.subr.bf16.mxu0 0
    %532 = vmatpush1.bf16.msra.mxu0 0
    %533 = vmatprep.subr.bf16.mxu0 0
    %534 = vmatpush1.bf16.msra.mxu0 0
    %535 = vmatprep.subr.bf16.mxu0 0
    %536 = vmatpush1.bf16.msra.mxu0 0
    %537 = vmatprep.subr.bf16.mxu0 0
    %538 = vmatpush1.bf16.msra.mxu0 0
    %539 = vmatprep.mubr.bf16.mxu0 0
    %540 = vmatmul.mubr.bf16.gmra.mrb[0].mxu0 %v505
    %v541 = vpop.f32.mrb[0].mxu0
    %v542 = vadd.f32 0.0, %v541
    %v543 = vpop.f32.mrb[0].mxu0
    %v544 = vpop.f32.mrb[0].mxu0
    %v545 = vpop.f32.mrb[0].mxu0
    %546 = vdwg.mxu0
    %v547 = vadd.f32 %v185, %v542
    %v548 = vxor.u32 %v547, 2147483648
    %v549 = vmul.f32 %v548, 1.442695
    %v550 = vpow.pop %v549
    %v551 = vadd.f32 %v550, 1.0
    %v552 = vrcp.pop %v551
    %v553 = vmul.f32 1.0, %v552
    %v554 = vtanh.pop %v547
    %v555 = vmul.f32 %v553, %v499
    %557 = vrot.lane.b32.xlu0 %v554, 64
    %v558 = vpop.permute.xlu0 %557
    %v560 = vmul.f32 %v553, %v558
    %562 = vrot.lane.b32.xlu0 %v560, 32
    %v563 = vpop.permute.xlu0 %562
    %v565 = vadd.f32 %v555, %v563
    %v566 = vtanh.pop %v565
    %568 = vrot.lane.b32.xlu0 %v566, 64
    %v569 = vpop.permute.xlu0 %568
    %v571 = vmul.f32 %v553, %v569
    %vm572 = vcmp.gt.f32.partialorder %v211, 0.0
    %v573 = vsel %vm572, 1, 0
    %574 = vset.pattern.permute.xlu0 0
    %575 = vperm.xlu0 %574, %v573
    %v576 = vpop.permute.xlu0 %575
    %vm577 = vcmp.eq.s32.totalorder %v576, 1
    %v578 = vsel %vm577, %v571, 0.0
    %v579 = vmul.f32 %v578, %v311
    %581 = vrot.lane.b32.xlu0 %v579, 32
    %v582 = vpop.permute.xlu0 %581
    %v584 = vsel %vm234, %v582, 0.0
    %585 = vadd.xlane.f32.xlu0 %v584
    %v586 = vpop.xlane.xlu0 %585
    %v587 = vsel %vm577, %v571, %v498
    %v588 = vsel %vm577, %v565, %v499
    %v589 = vpack.c.bf16 %v587, %v587
    %591 = vrot.lane.b32.xlu0 %v589, 32
    %v592 = vpop.permute.xlu0 %591
    %v594 = vsel %vm234, %v592, 0
    %596 = vmatprep.subr.bf16.mxu0 0
    %597 = vmatpush1.bf16.msra.mxu0 %v230
    %598 = vmatprep.subr.bf16.mxu0 0
    %599 = vmatpush1.bf16.msra.mxu0 %v231
    %600 = vmatprep.subr.bf16.mxu0 0
    %601 = vmatpush1.bf16.msra.mxu0 0
    %602 = vmatprep.subr.bf16.mxu0 0
    %603 = vmatpush1.bf16.msra.mxu0 0
    %604 = vmatprep.subr.bf16.mxu0 0
    %605 = vmatpush1.bf16.msra.mxu0 0
    %606 = vmatprep.subr.bf16.mxu0 0
    %607 = vmatpush1.bf16.msra.mxu0 0
    %608 = vmatprep.subr.bf16.mxu0 0
    %609 = vmatpush1.bf16.msra.mxu0 0
    %610 = vmatprep.subr.bf16.mxu0 0
    %611 = vmatpush1.bf16.msra.mxu0 0
    %612 = vmatprep.subr.bf16.mxu0 0
    %613 = vmatpush1.bf16.msra.mxu0 0
    %614 = vmatprep.subr.bf16.mxu0 0
    %615 = vmatpush1.bf16.msra.mxu0 0
    %616 = vmatprep.subr.bf16.mxu0 0
    %617 = vmatpush1.bf16.msra.mxu0 0
    %618 = vmatprep.subr.bf16.mxu0 0
    %619 = vmatpush1.bf16.msra.mxu0 0
    %620 = vmatprep.subr.bf16.mxu0 0
    %621 = vmatpush1.bf16.msra.mxu0 0
    %622 = vmatprep.subr.bf16.mxu0 0
    %623 = vmatpush1.bf16.msra.mxu0 0
    %624 = vmatprep.subr.bf16.mxu0 0
    %625 = vmatpush1.bf16.msra.mxu0 0
    %626 = vmatprep.subr.bf16.mxu0 0
    %627 = vmatpush1.bf16.msra.mxu0 0
    %628 = vmatprep.mubr.bf16.mxu0 0
    %629 = vmatmul.mubr.bf16.gmra.mrb[0].mxu0 %v594
    %v630 = vpop.f32.mrb[0].mxu0
    %v631 = vadd.f32 0.0, %v630
    %v632 = vpop.f32.mrb[0].mxu0
    %v633 = vpop.f32.mrb[0].mxu0
    %v634 = vpop.f32.mrb[0].mxu0
    %635 = vdwg.mxu0
    %v636 = vadd.f32 %v190, %v631
    %v637 = vxor.u32 %v636, 2147483648
    %v638 = vmul.f32 %v637, 1.442695
    %v639 = vpow.pop %v638
    %v640 = vadd.f32 %v639, 1.0
    %v641 = vrcp.pop %v640
    %v642 = vmul.f32 1.0, %v641
    %v643 = vtanh.pop %v636
    %v644 = vmul.f32 %v642, %v588
    %646 = vrot.lane.b32.xlu0 %v643, 64
    %v647 = vpop.permute.xlu0 %646
    %v649 = vmul.f32 %v642, %v647
    %651 = vrot.lane.b32.xlu0 %v649, 32
    %v652 = vpop.permute.xlu0 %651
    %v654 = vadd.f32 %v644, %v652
    %v655 = vtanh.pop %v654
    %657 = vrot.lane.b32.xlu0 %v655, 64
    %v658 = vpop.permute.xlu0 %657
    %v660 = vmul.f32 %v642, %v658
    %vm661 = vcmp.gt.f32.partialorder %v212, 0.0
    %v662 = vsel %vm661, 1, 0
    %663 = vset.pattern.permute.xlu0 0
    %664 = vperm.xlu0 %663, %v662
    %v665 = vpop.permute.xlu0 %664
    %vm666 = vcmp.eq.s32.totalorder %v665, 1
    %v667 = vsel %vm666, %v660, 0.0
    %v668 = vmul.f32 %v667, %v311
    %670 = vrot.lane.b32.xlu0 %v668, 32
    %v671 = vpop.permute.xlu0 %670
    %v673 = vsel %vm234, %v671, 0.0
    %674 = vadd.xlane.f32.xlu0 %v673
    %v675 = vpop.xlane.xlu0 %674
    %v676 = vsel %vm666, %v660, %v587
    %v677 = vsel %vm666, %v654, %v588
    %v678 = vpack.c.bf16 %v676, %v676
    %680 = vrot.lane.b32.xlu0 %v678, 32
    %v681 = vpop.permute.xlu0 %680
    %v683 = vsel %vm234, %v681, 0
    %685 = vmatprep.subr.bf16.mxu0 0
    %686 = vmatpush1.bf16.msra.mxu0 %v230
    %687 = vmatprep.subr.bf16.mxu0 0
    %688 = vmatpush1.bf16.msra.mxu0 %v231
    %689 = vmatprep.subr.bf16.mxu0 0
    %690 = vmatpush1.bf16.msra.mxu0 0
    %691 = vmatprep.subr.bf16.mxu0 0
    %692 = vmatpush1.bf16.msra.mxu0 0
    %693 = vmatprep.subr.bf16.mxu0 0
    %694 = vmatpush1.bf16.msra.mxu0 0
    %695 = vmatprep.subr.bf16.mxu0 0
    %696 = vmatpush1.bf16.msra.mxu0 0
    %697 = vmatprep.subr.bf16.mxu0 0
    %698 = vmatpush1.bf16.msra.mxu0 0
    %699 = vmatprep.subr.bf16.mxu0 0
    %700 = vmatpush1.bf16.msra.mxu0 0
    %701 = vmatprep.subr.bf16.mxu0 0
    %702 = vmatpush1.bf16.msra.mxu0 0
    %703 = vmatprep.subr.bf16.mxu0 0
    %704 = vmatpush1.bf16.msra.mxu0 0
    %705 = vmatprep.subr.bf16.mxu0 0
    %706 = vmatpush1.bf16.msra.mxu0 0
    %707 = vmatprep.subr.bf16.mxu0 0
    %708 = vmatpush1.bf16.msra.mxu0 0
    %709 = vmatprep.subr.bf16.mxu0 0
    %710 = vmatpush1.bf16.msra.mxu0 0
    %711 = vmatprep.subr.bf16.mxu0 0
    %712 = vmatpush1.bf16.msra.mxu0 0
    %713 = vmatprep.subr.bf16.mxu0 0
    %714 = vmatpush1.bf16.msra.mxu0 0
    %715 = vmatprep.subr.bf16.mxu0 0
    %716 = vmatpush1.bf16.msra.mxu0 0
    %717 = vmatprep.mubr.bf16.mxu0 0
    %718 = vmatmul.mubr.bf16.gmra.mrb[0].mxu0 %v683
    %v719 = vpop.f32.mrb[0].mxu0
    %v720 = vadd.f32 0.0, %v719
    %v721 = vpop.f32.mrb[0].mxu0
    %v722 = vpop.f32.mrb[0].mxu0
    %v723 = vpop.f32.mrb[0].mxu0
    %724 = vdwg.mxu0
    %v725 = vadd.f32 %v193, %v720
    %v726 = vxor.u32 %v725, 2147483648
    %v727 = vmul.f32 %v726, 1.442695
    %v728 = vpow.pop %v727
    %v729 = vadd.f32 %v728, 1.0
    %v730 = vrcp.pop %v729
    %v731 = vmul.f32 1.0, %v730
    %v732 = vtanh.pop %v725
    %v733 = vmul.f32 %v731, %v677
    %735 = vrot.lane.b32.xlu0 %v732, 64
    %v736 = vpop.permute.xlu0 %735
    %v738 = vmul.f32 %v731, %v736
    %740 = vrot.lane.b32.xlu0 %v738, 32
    %v741 = vpop.permute.xlu0 %740
    %v743 = vadd.f32 %v733, %v741
    %v744 = vtanh.pop %v743
    %746 = vrot.lane.b32.xlu0 %v744, 64
    %v747 = vpop.permute.xlu0 %746
    %v749 = vmul.f32 %v731, %v747
    %vm750 = vcmp.gt.f32.partialorder %v213, 0.0
    %v751 = vsel %vm750, 1, 0
    %752 = vset.pattern.permute.xlu0 0
    %753 = vperm.xlu0 %752, %v751
    %v754 = vpop.permute.xlu0 %753
    %vm755 = vcmp.eq.s32.totalorder %v754, 1
    %v756 = vsel %vm755, %v749, 0.0
    %v757 = vmul.f32 %v756, %v311
    %759 = vrot.lane.b32.xlu0 %v757, 32
    %v760 = vpop.permute.xlu0 %759
    %v762 = vsel %vm234, %v760, 0.0
    %763 = vadd.xlane.f32.xlu0 %v762
    %v764 = vpop.xlane.xlu0 %763
    %v765 = vsel %vm755, %v749, %v676
    %v766 = vsel %vm755, %v743, %v677
    %v767 = vpack.c.bf16 %v765, %v765
    %769 = vrot.lane.b32.xlu0 %v767, 32
    %v770 = vpop.permute.xlu0 %769
    %v772 = vsel %vm234, %v770, 0
    %774 = vmatprep.subr.bf16.mxu0 0
    %775 = vmatpush1.bf16.msra.mxu0 %v230
    %776 = vmatprep.subr.bf16.mxu0 0
    %777 = vmatpush1.bf16.msra.mxu0 %v231
    %778 = vmatprep.subr.bf16.mxu0 0
    %779 = vmatpush1.bf16.msra.mxu0 0
    %780 = vmatprep.subr.bf16.mxu0 0
    %781 = vmatpush1.bf16.msra.mxu0 0
    %782 = vmatprep.subr.bf16.mxu0 0
    %783 = vmatpush1.bf16.msra.mxu0 0
    %784 = vmatprep.subr.bf16.mxu0 0
    %785 = vmatpush1.bf16.msra.mxu0 0
    %786 = vmatprep.subr.bf16.mxu0 0
    %787 = vmatpush1.bf16.msra.mxu0 0
    %788 = vmatprep.subr.bf16.mxu0 0
    %789 = vmatpush1.bf16.msra.mxu0 0
    %790 = vmatprep.subr.bf16.mxu0 0
    %791 = vmatpush1.bf16.msra.mxu0 0
    %792 = vmatprep.subr.bf16.mxu0 0
    %793 = vmatpush1.bf16.msra.mxu0 0
    %794 = vmatprep.subr.bf16.mxu0 0
    %795 = vmatpush1.bf16.msra.mxu0 0
    %796 = vmatprep.subr.bf16.mxu0 0
    %797 = vmatpush1.bf16.msra.mxu0 0
    %798 = vmatprep.subr.bf16.mxu0 0
    %799 = vmatpush1.bf16.msra.mxu0 0
    %800 = vmatprep.subr.bf16.mxu0 0
    %801 = vmatpush1.bf16.msra.mxu0 0
    %802 = vmatprep.subr.bf16.mxu0 0
    %803 = vmatpush1.bf16.msra.mxu0 0
    %804 = vmatprep.subr.bf16.mxu0 0
    %805 = vmatpush1.bf16.msra.mxu0 0
    %806 = vmatprep.mubr.bf16.mxu0 0
    %807 = vmatmul.mubr.bf16.gmra.mrb[0].mxu0 %v772
    %v808 = vpop.f32.mrb[0].mxu0
    %v809 = vadd.f32 0.0, %v808
    %v810 = vpop.f32.mrb[0].mxu0
    %v811 = vpop.f32.mrb[0].mxu0
    %v812 = vpop.f32.mrb[0].mxu0
    %813 = vdwg.mxu0
    %v814 = vadd.f32 %v198, %v809
    %v815 = vxor.u32 %v814, 2147483648
    %v816 = vmul.f32 %v815, 1.442695
    %v817 = vpow.pop %v816
    %v818 = vadd.f32 %v817, 1.0
    %v819 = vrcp.pop %v818
    %v820 = vmul.f32 1.0, %v819
    %v821 = vtanh.pop %v814
    %v822 = vmul.f32 %v820, %v766
    %824 = vrot.lane.b32.xlu0 %v821, 64
    %v825 = vpop.permute.xlu0 %824
    %v827 = vmul.f32 %v820, %v825
    %829 = vrot.lane.b32.xlu0 %v827, 32
    %v830 = vpop.permute.xlu0 %829
    %v832 = vadd.f32 %v822, %v830
    %v833 = vtanh.pop %v832
    %835 = vrot.lane.b32.xlu0 %v833, 64
    %v836 = vpop.permute.xlu0 %835
    %v838 = vmul.f32 %v820, %v836
    %vm839 = vcmp.gt.f32.partialorder %v214, 0.0
    %v840 = vsel %vm839, 1, 0
    %841 = vset.pattern.permute.xlu0 0
    %842 = vperm.xlu0 %841, %v840
    %v843 = vpop.permute.xlu0 %842
    %vm844 = vcmp.eq.s32.totalorder %v843, 1
    %v845 = vsel %vm844, %v838, 0.0
    %v846 = vmul.f32 %v845, %v311
    %848 = vrot.lane.b32.xlu0 %v846, 32
    %v849 = vpop.permute.xlu0 %848
    %v851 = vsel %vm234, %v849, 0.0
    %852 = vadd.xlane.f32.xlu0 %v851
    %v853 = vpop.xlane.xlu0 %852
    %v854 = vsel %vm844, %v838, %v765
    %v855 = vsel %vm844, %v832, %v766
    %v856 = vpack.c.bf16 %v854, %v854
    %858 = vrot.lane.b32.xlu0 %v856, 32
    %v859 = vpop.permute.xlu0 %858
    %v861 = vsel %vm234, %v859, 0
    %863 = vmatprep.subr.bf16.mxu0 0
    %864 = vmatpush1.bf16.msra.mxu0 %v230
    %865 = vmatprep.subr.bf16.mxu0 0
    %866 = vmatpush1.bf16.msra.mxu0 %v231
    %867 = vmatprep.subr.bf16.mxu0 0
    %868 = vmatpush1.bf16.msra.mxu0 0
    %869 = vmatprep.subr.bf16.mxu0 0
    %870 = vmatpush1.bf16.msra.mxu0 0
    %871 = vmatprep.subr.bf16.mxu0 0
    %872 = vmatpush1.bf16.msra.mxu0 0
    %873 = vmatprep.subr.bf16.mxu0 0
    %874 = vmatpush1.bf16.msra.mxu0 0
    %875 = vmatprep.subr.bf16.mxu0 0
    %876 = vmatpush1.bf16.msra.mxu0 0
    %877 = vmatprep.subr.bf16.mxu0 0
    %878 = vmatpush1.bf16.msra.mxu0 0
    %879 = vmatprep.subr.bf16.mxu0 0
    %880 = vmatpush1.bf16.msra.mxu0 0
    %881 = vmatprep.subr.bf16.mxu0 0
    %882 = vmatpush1.bf16.msra.mxu0 0
    %883 = vmatprep.subr.bf16.mxu0 0
    %884 = vmatpush1.bf16.msra.mxu0 0
    %885 = vmatprep.subr.bf16.mxu0 0
    %886 = vmatpush1.bf16.msra.mxu0 0
    %887 = vmatprep.subr.bf16.mxu0 0
    %888 = vmatpush1.bf16.msra.mxu0 0
    %889 = vmatprep.subr.bf16.mxu0 0
    %890 = vmatpush1.bf16.msra.mxu0 0
    %891 = vmatprep.subr.bf16.mxu0 0
    %892 = vmatpush1.bf16.msra.mxu0 0
    %893 = vmatprep.subr.bf16.mxu0 0
    %894 = vmatpush1.bf16.msra.mxu0 0
    %895 = vmatprep.mubr.bf16.mxu0 0
    %896 = vmatmul.mubr.bf16.gmra.mrb[0].mxu0 %v861
    %v897 = vpop.f32.mrb[0].mxu0
    %v898 = vadd.f32 0.0, %v897
    %v899 = vpop.f32.mrb[0].mxu0
    %v900 = vpop.f32.mrb[0].mxu0
    %v901 = vpop.f32.mrb[0].mxu0
    %902 = vdwg.mxu0
    %v903 = vadd.f32 %v201, %v898
    %v904 = vxor.u32 %v903, 2147483648
    %v905 = vmul.f32 %v904, 1.442695
    %v906 = vpow.pop %v905
    %v907 = vadd.f32 %v906, 1.0
    %v908 = vrcp.pop %v907
    %v909 = vmul.f32 1.0, %v908
    %v910 = vtanh.pop %v903
    %v911 = vmul.f32 %v909, %v855
    %913 = vrot.lane.b32.xlu0 %v910, 64
    %v914 = vpop.permute.xlu0 %913
    %v916 = vmul.f32 %v909, %v914
    %918 = vrot.lane.b32.xlu0 %v916, 32
    %v919 = vpop.permute.xlu0 %918
    %v921 = vadd.f32 %v911, %v919
    %v922 = vtanh.pop %v921
    %924 = vrot.lane.b32.xlu0 %v922, 64
    %v925 = vpop.permute.xlu0 %924
    %v927 = vmul.f32 %v909, %v925
    %vm928 = vcmp.gt.f32.partialorder %v215, 0.0
    %v929 = vsel %vm928, 1, 0
    %930 = vset.pattern.permute.xlu0 0
    %931 = vperm.xlu0 %930, %v929
    %v932 = vpop.permute.xlu0 %931
    %vm933 = vcmp.eq.s32.totalorder %v932, 1
    %v934 = vsel %vm933, %v927, 0.0
    %v935 = vmul.f32 %v934, %v311
    %937 = vrot.lane.b32.xlu0 %v935, 32
    %v938 = vpop.permute.xlu0 %937
    %v940 = vsel %vm234, %v938, 0.0
    %941 = vadd.xlane.f32.xlu0 %v940
    %v942 = vpop.xlane.xlu0 %941
    %v943 = vmax.f32 %v320, %v408
    %v944 = vmax.f32 %v943, %v497
    %v945 = vmax.f32 %v944, %v586
    %v946 = vmax.f32 %v945, %v675
    %v947 = vmax.f32 %v946, %v764
    %v948 = vmax.f32 %v947, %v853
    %v949 = vmax.f32 %v948, %v942
    %v950 = vsub.f32 %v320, %v949
    %v951 = vmul.f32 %v950, 1.442695
    %v952 = vpow.pop %v951
    %v953 = vsub.f32 %v408, %v949
    %v954 = vmul.f32 %v953, 1.442695
    %v955 = vpow.pop %v954
    %v956 = vsub.f32 %v497, %v949
    %v957 = vmul.f32 %v956, 1.442695
    %v958 = vpow.pop %v957
    %v959 = vsub.f32 %v586, %v949
    %v960 = vmul.f32 %v959, 1.442695
    %v961 = vpow.pop %v960
    %v962 = vsub.f32 %v675, %v949
    %v963 = vmul.f32 %v962, 1.442695
    %v964 = vpow.pop %v963
    %v965 = vsub.f32 %v764, %v949
    %v966 = vmul.f32 %v965, 1.442695
    %v967 = vpow.pop %v966
    %v968 = vsub.f32 %v853, %v949
    %v969 = vmul.f32 %v968, 1.442695
    %v970 = vpow.pop %v969
    %v971 = vsub.f32 %v942, %v949
    %v972 = vmul.f32 %v971, 1.442695
    %v973 = vpow.pop %v972
    %v974 = vadd.f32 %v952, %v955
    %v975 = vadd.f32 %v974, %v958
    %v976 = vadd.f32 %v975, %v961
    %v977 = vadd.f32 %v976, %v964
    %v978 = vadd.f32 %v977, %v967
    %v979 = vadd.f32 %v978, %v970
    %v980 = vadd.f32 %v979, %v973
    %v981 = vmul.f32 %v952, %v309
    %v982 = vmul.f32 %v955, %v400
    %v983 = vadd.f32 %v981, %v982
    %v984 = vmul.f32 %v958, %v489
    %v985 = vadd.f32 %v983, %v984
    %v986 = vmul.f32 %v961, %v578
    %v987 = vadd.f32 %v985, %v986
    %v988 = vmul.f32 %v964, %v667
    %v989 = vadd.f32 %v987, %v988
    %v990 = vmul.f32 %v967, %v756
    %v991 = vadd.f32 %v989, %v990
    %v992 = vmul.f32 %v970, %v845
    %v993 = vadd.f32 %v991, %v992
    %v994 = vmul.f32 %v973, %v934
    %v995 = vadd.f32 %v993, %v994
    %v996 = vrcp.pop %v980
    %v997 = vmul.f32 %v995, %v996
    %v998 = vld [vmem:[#allocation5] sm:$0xff]
    %v999 = vld [vmem:[#allocation5 + $0x8] sm:$0xff]
    %v1000 = vld [vmem:[#allocation5 + $0x10] sm:$0xff]
    %v1001 = vld [vmem:[#allocation5 + $0x18] sm:$0xff]
    %v1002 = vld [vmem:[%s7] sm:$0x1]
    %v1004 = vlaneseq
    %v1005 = vshrl.u32 %v1004, 7
    %v1006 = vsub.s32 0, %v1005
    %v1007 = vrot.slane %v1002, %v1006
    %1010 = vrot.lane.b32.xlu0 %v997, 32
    %v1011 = vpop.permute.xlu0 %1010
    %v1012 = vsel %vm234, %v1011, 0
    %1014 = vmatprep.subr.mxu0 0.0
    %1015 = vmatpush1.msra.mxu0 %v998
    %1016 = vmatprep.subr.mxu0 0.0
    %1017 = vmatpush1.msra.mxu0 %v999
    %1018 = vmatprep.subr.mxu0 0.0
    %1019 = vmatpush1.msra.mxu0 %v1000
    %1020 = vmatprep.subr.mxu0 0.0
    %1021 = vmatpush1.msra.mxu0 %v1001
    %1022 = vmatprep.subr.mxu0 0.0
    %1023 = vmatpush1.msra.mxu0 0.0
    %1024 = vmatprep.subr.mxu0 0.0
    %1025 = vmatpush1.msra.mxu0 0.0
    %1026 = vmatprep.subr.mxu0 0.0
    %1027 = vmatpush1.msra.mxu0 0.0
    %1028 = vmatprep.subr.mxu0 0.0
    %1029 = vmatpush1.msra.mxu0 0.0
    %1030 = vmatprep.subr.mxu0 0.0
    %1031 = vmatpush1.msra.mxu0 0.0
    %1032 = vmatprep.subr.mxu0 0.0
    %1033 = vmatpush1.msra.mxu0 0.0
    %1034 = vmatprep.subr.mxu0 0.0
    %1035 = vmatpush1.msra.mxu0 0.0
    %1036 = vmatprep.subr.mxu0 0.0
    %1037 = vmatpush1.msra.mxu0 0.0
    %1038 = vmatprep.subr.mxu0 0.0
    %1039 = vmatpush1.msra.mxu0 0.0
    %1040 = vmatprep.subr.mxu0 0.0
    %1041 = vmatpush1.msra.mxu0 0.0
    %1042 = vmatprep.subr.mxu0 0.0
    %1043 = vmatpush1.msra.mxu0 0.0
    %1044 = vmatprep.subr.mxu0 0.0
    %1045 = vmatpush1.msra.mxu0 0.0
    %1046 = vmatprep.subr.mxu0 0.0
    %1047 = vmatpush1.msra.mxu0 0.0
    %1048 = vmatprep.subr.mxu0 0.0
    %1049 = vmatpush1.msra.mxu0 0.0
    %1050 = vmatprep.subr.mxu0 0.0
    %1051 = vmatpush1.msra.mxu0 0.0
    %1052 = vmatprep.subr.mxu0 0.0
    %1053 = vmatpush1.msra.mxu0 0.0
    %1054 = vmatprep.subr.mxu0 0.0
    %1055 = vmatpush1.msra.mxu0 0.0
    %1056 = vmatprep.subr.mxu0 0.0
    %1057 = vmatpush1.msra.mxu0 0.0
    %1058 = vmatprep.subr.mxu0 0.0
    %1059 = vmatpush1.msra.mxu0 0.0
    %1060 = vmatprep.subr.mxu0 0.0
    %1061 = vmatpush1.msra.mxu0 0.0
    %1062 = vmatprep.subr.mxu0 0.0
    %1063 = vmatpush1.msra.mxu0 0.0
    %1064 = vmatprep.subr.mxu0 0.0
    %1065 = vmatpush1.msra.mxu0 0.0
    %1066 = vmatprep.subr.mxu0 0.0
    %1067 = vmatpush1.msra.mxu0 0.0
    %1068 = vmatprep.subr.mxu0 0.0
    %1069 = vmatpush1.msra.mxu0 0.0
    %1070 = vmatprep.subr.mxu0 0.0
    %1071 = vmatpush1.msra.mxu0 0.0
    %1072 = vmatprep.subr.mxu0 0.0
    %1073 = vmatpush1.msra.mxu0 0.0
    %1074 = vmatprep.subr.mxu0 0.0
    %1075 = vmatpush1.msra.mxu0 0.0
    %1076 = vmatprep.subr.mxu0 0.0
    %1077 = vmatpush1.msra.mxu0 0.0
    %1078 = vmatprep.mubr.f32.mxu0 0.0
    %1079 = vmatmul.mubr.f32.gmra.mrb[0].mxu0 %v1012
    %v1080 = vpop.f32.mrb[0].mxu0
    %v1081 = vadd.f32 %v1007, %v1080
    %v1082 = vpop.f32.mrb[0].mxu0
    %1083 = vdwg.mxu0
    %1084 = vst [vmem:[#allocation7] sm:$0xff] %v1081
    // Predicated region
    $region42: #{tpu_custom_call.1} parent=1 // pred_check
      _
    $region43: #{tpu_custom_call.1} parent=1 // pred_check_branch
      %1086 = sbr.rel (0) target = $region45
    $region44: #{tpu_custom_call.1} parent=1 // pred_region
      %s1088 = ssub.s32 128, 128
      %1089 = vsyncadd [#allocation4], %s1088
      %s1091 = sshll.u32 [#allocation7], 4
      %s1092 = int_to_ptr.vmem [resolvable:$true] %s1091
      %1094 = dma.vmem_to_hbm [thread:$0]  %s1092, 128, %s8, [#allocation4]
    $region45: #{tpu_custom_call.1} parent=1 // pred_fallthru
      _
    // Predicated region
    $region46: #{tpu_custom_call.1} parent=1 // pred_check
      _
    $region47: #{tpu_custom_call.1} parent=1 // pred_check_branch
      %1096 = sbr.rel (0) target = $region49
    $region48: #{tpu_custom_call.1} parent=1 // pred_region
      %1097 = dma.done [#allocation4], 128
    $region49: #{tpu_custom_call.1} parent=1 // pred_fallthru
      _
    %1098 = vsyncpa [#allocation3], 1
    %1099 = vsyncpa [#allocation6], 1
    %1100 = vsyncpa [#allocation4], 1

</llo_original>
